<compile_context>
chip_gen: v5e
topology: v5e:2x2
jax: 0.10.0
libtpu: 0.0.40
codegen_flags: <defaults>
</compile_context>

<pallas_src>
import numpy as np
import jax
import jax.numpy as jnp
from jax.experimental import pallas as pl
from jax.experimental.pallas import tpu as pltpu


def _silu(x):
    # x * sigmoid(x); reciprocal goes to the EUP slot.
    return x * pl.reciprocal(1.0 + jnp.exp(-x), approx=True)


def _softplus(x):
    return jnp.maximum(x, 0.0) + jnp.log1p(jnp.exp(-jnp.abs(x)))


def _vmem_limit_bytes():
    # ~3/4 of physical VMEM: ~96 MiB on v5e/v6e (128 MiB), ~48 MiB on v7x (64 MiB).
    try:
        cap = getattr(pltpu.get_tpu_info(), "vmem_capacity_bytes", 128 << 20)
        return int(min(cap * 3 // 4, 100 << 20))
    except Exception:
        return 64 << 20


# --------------------------------------------------------------------------
# Kernel 1: RMSNorm + chunk-wise SConv layer (+ residual).
# Grid = (B, num_chunks), dims = ("parallel", "arbitrary").
# Hidden state carried across chunks in a (1, D) VMEM scratch (per core).
# Correctness of the carry relies on the chunk axis being innermost (it is:
# the grid iterates row-major, so all chunks of one batch run consecutively).
# --------------------------------------------------------------------------
def _sconv_chunk_kernel(x_ref, wcat_ref, bcat_ref, dpar_ref, lna_ref,
                        m_ref, mt_ref, wy_ref, hinit_ref, out_ref, hid_ref):
    k = pl.program_id(1)
    C = x_ref.shape[1]
    D = x_ref.shape[2]
    H = lna_ref.shape[1]
    inv_i = 1.0 / (D // H)

    # (Re-)initialize the carried hidden state at the first chunk of each batch.
    @pl.when(k == 0)
    def _():
        hid_ref[...] = hinit_ref[...]

    x0 = x_ref[0]                                   # (C, D) f32, pre-norm input

    # Inclusive lower-triangular mask generated in-kernel (no HBM fetch).
    row = jax.lax.broadcasted_iota(jnp.int32, (C, C), 0)
    col = jax.lax.broadcasted_iota(jnp.int32, (C, C), 1)
    tril = (col <= row).astype(jnp.float32)         # (C, C)

    dpar = dpar_ref[...]                            # (4, D): packed D-sized params
    w_ns = dpar[0:1, :]                             # RMSNorm weight
    gn_g = dpar[1:2, :]                             # GroupNorm gamma (head-expanded)
    gn_b = dpar[2:3, :]                             # GroupNorm beta  (head-expanded)
    by   = dpar[3:4, :]                             # fc_y bias

    # --- RMSNorm (norm_sconv), eps = 1e-6 ---------------------------------
    ms = jnp.mean(x0 * x0, axis=-1, keepdims=True)
    xn = x0 * jax.lax.rsqrt(ms + 1e-6) * w_ns       # (C, D) f32

    # --- Fused projections: [fc_z | fc_z_act | fc_y_act | fc_dt] ----------
    proj = jnp.dot(xn.astype(jnp.bfloat16), wcat_ref[...],
                   preferred_element_type=jnp.float32) + bcat_ref[...]  # (C, 3D+H)
    z_lin  = proj[:, 0 * D:1 * D]
    z_gate = proj[:, 1 * D:2 * D]
    y_gate = proj[:, 2 * D:3 * D]
    dt     = proj[:, 3 * D:3 * D + H]               # (C, H)

    z = z_lin * _silu(z_gate)                       # (C, D) f32

    # --- Decay scan (all heads at once) -----------------------------------
    neg_a = -jnp.exp(lna_ref[...])                  # (1, H)
    ln_da = neg_a * _softplus(dt)                   # (C, H), <= 0

    # Inclusive cumsum along the chunk via a small f32 tril matmul.
    c = jnp.dot(tril, ln_da, preferred_element_type=jnp.float32)        # (C, H)

    mt = mt_ref[...]                                # (H, D) head -> lanes broadcast
    # Partially stabilized factorization: center the exponent per head.
    # TODO(synk): row-stabilized A = exp(c_l - c_m) for extreme decay ranges.
    r = 0.5 * (c[0:1, :] + c[C - 1:C, :])           # (1, H)
    e_full    = jnp.dot(jnp.exp(c - r), mt, preferred_element_type=jnp.float32)
    einv_full = jnp.dot(jnp.exp(r - c), mt, preferred_element_type=jnp.float32)
    # inner[l] = sum_{m<=l} exp(c_l - c_m) z[m]: the dominant (C,C)@(C,D) MXU op
    # -> bf16 operands (tril is exact in bf16), f32 accumulation.
    inner = e_full * jnp.dot(tril.astype(jnp.bfloat16),
                             (einv_full * z).astype(jnp.bfloat16),
                             preferred_element_type=jnp.float32)        # (C, D)
    # Cross term uses un-centered exp(c) <= 1 (no overflow, benign underflow).
    cross = jnp.dot(jnp.exp(c), mt, preferred_element_type=jnp.float32) * hid_ref[...]
    h_full = inner + cross                          # (C, D)

    # Coalesced hidden-state writeback: one lane-dense (1, D) store.
    hid_ref[...] = h_full[C - 1:C, :]

    # --- GroupNorm(num_head) vectorized over heads via pooling matmuls ----
    # TODO(synk): switch to a VPU/XLU reshape-reduction once the kernel is
    # MXU-bound (H << MXU width makes these low-utilization MXU passes).
    m_mat = m_ref[...]                              # (D, H) one-hot head map
    mean = jnp.dot(h_full, m_mat, preferred_element_type=jnp.float32) * inv_i
    mean_full = jnp.dot(mean, mt, preferred_element_type=jnp.float32)
    dcen = h_full - mean_full
    var = jnp.dot(dcen * dcen, m_mat, preferred_element_type=jnp.float32) * inv_i
    var_full = jnp.dot(var, mt, preferred_element_type=jnp.float32)
    hn = dcen * jax.lax.rsqrt(var_full + 1e-5) * gn_g + gn_b            # (C, D)

    # --- fc_y (single full-width matmul) + gating + residual --------------
    y = (jnp.dot(hn.astype(jnp.bfloat16), wy_ref[...],
                 preferred_element_type=jnp.float32) + by) * _silu(y_gate)
    out_ref[0] = y + x0


# --------------------------------------------------------------------------
# Kernel 2: RMSNorm + SwiGLU FFN (+ residual), tiled over (B, L, F).
# Grid = (B, L//TL, F//TF), dims = ("parallel", "parallel", "arbitrary").
# The output block is resident across fj, so the Wo contraction accumulates
# straight into out_ref (residual + bias folded into the fj==0 init).
# --------------------------------------------------------------------------
def _ffn_kernel(x_ref, wnf_ref, bo_ref, wf_ref, bf_ref, wfa_ref, bfa_ref, wo_ref,
                out_ref, xn_ref):
    fj = pl.program_id(2)
    x0 = x_ref[0]                                   # (TL, D) f32

    @pl.when(fj == 0)
    def _():
        ms = jnp.mean(x0 * x0, axis=-1, keepdims=True)
        xn_ref[...] = (x0 * jax.lax.rsqrt(ms + 1e-6) * wnf_ref[...]).astype(jnp.bfloat16)
        out_ref[0] = x0 + bo_ref[...]               # residual + output bias

    xn = xn_ref[...]                                # (TL, D) bf16 cached
    u = jnp.dot(xn, wf_ref[...], preferred_element_type=jnp.float32) + bf_ref[...]
    g = jnp.dot(xn, wfa_ref[...], preferred_element_type=jnp.float32) + bfa_ref[...]
    u = u * _silu(g)                                # (TL, TF) f32
    out_ref[0] += jnp.dot(u.astype(jnp.bfloat16), wo_ref[...],
                          preferred_element_type=jnp.float32)


# --------------------------------------------------------------------------
# Wrapper
# --------------------------------------------------------------------------
def sconv_block_forward(x, params, chunk_size, *, tl=256, tf=512):
    B, L, D = x.shape
    H = params["ln_a"].shape[0]
    I = D // H
    C = chunk_size                     # prefer multiples of 128 (v5e) / 256 (v6e,v7x)
    assert L % C == 0
    num_chunks = L // C
    f32, bf16 = jnp.float32, jnp.bfloat16
    vmem_limit = _vmem_limit_bytes()

    # ---- Kernel 1 parameter packing (done once, outside the kernel) ------
    wcat = jnp.concatenate([params["Wz"].T, params["Wza"].T,
                            params["Wya"].T, params["Wdt"].T], axis=1).astype(bf16)
    bcat = jnp.concatenate([params["bz"], params["bza"],
                            params["bya"], params["bdt"]])[None, :].astype(f32)
    dpar = jnp.stack([params["w_ns"],
                      jnp.repeat(params["gn_g"], I),
                      jnp.repeat(params["gn_b"], I),
                      params["by"]], axis=0).astype(f32)               # (4, D)
    lna = params["ln_a"][None, :].astype(f32)                          # (1, H)
    head_of = jnp.arange(D, dtype=jnp.int32) // I
    m_mat = (head_of[:, None] == jnp.arange(H, dtype=jnp.int32)[None, :]).astype(f32)
    mt_mat = m_mat.T                                                   # (H, D)
    wy = params["Wy"].T.astype(bf16)                                   # (D, D)
    h_init = params["h_init"].reshape(1, D).astype(f32)

    sconv_in = [wcat, bcat, dpar, lna, m_mat, mt_mat, wy, h_init]

    def run_sconv(single_buffer):
        def const_spec(p):
            idx = (lambda b, k, _n=p.ndim: (0,) * _n)
            if single_buffer:
                # Constant operands: one VMEM buffer is enough (index never changes).
                return pl.BlockSpec(tuple(p.shape), idx, pipeline_mode=pl.Buffered(1))
            return pl.BlockSpec(tuple(p.shape), idx)

        return pl.pallas_call(
            _sconv_chunk_kernel,
            out_shape=jax.ShapeDtypeStruct((B, L, D), jnp.float32),
            grid=(B, num_chunks),
            in_specs=[pl.BlockSpec((1, C, D), lambda b, k: (b, k, 0))]
                     + [const_spec(p) for p in sconv_in],
            out_specs=pl.BlockSpec((1, C, D), lambda b, k: (b, k, 0)),
            scratch_shapes=[pltpu.VMEM((1, D), jnp.float32)],
            compiler_params=pltpu.CompilerParams(
                dimension_semantics=("parallel", "arbitrary"),
                vmem_limit_bytes=vmem_limit),
        )(x, *sconv_in)

    try:
        x2 = run_sconv(single_buffer=True)
    except Exception:
        # TODO(synk): pl.Buffered(1) rejected on this JAX/Mosaic version;
        # fall back to default double-buffered constant blocks.
        x2 = run_sconv(single_buffer=False)

    # ---- Kernel 2: FFN, tiled over L and F --------------------------------
    F = params["Wf"].shape[0]
    tl = min(tl, L)
    tf = min(tf, F)
    assert L % tl == 0 and F % tf == 0
    wnf = params["w_nf"][None, :].astype(f32)
    bo = params["bo"][None, :].astype(f32)
    wf = params["Wf"].T.astype(bf16)      # (D, F)
    wfa = params["Wfa"].T.astype(bf16)    # (D, F)
    wo = params["Wo"].T.astype(bf16)      # (F, D)
    bf_ = params["bf"][None, :].astype(f32)
    bfa = params["bfa"][None, :].astype(f32)

    out = pl.pallas_call(
        _ffn_kernel,
        out_shape=jax.ShapeDtypeStruct((B, L, D), jnp.float32),
        grid=(B, L // tl, F // tf),
        in_specs=[
            pl.BlockSpec((1, tl, D), lambda b, li, fj: (b, li, 0)),   # x
            pl.BlockSpec((1, D),     lambda b, li, fj: (0, 0)),       # w_nf
            pl.BlockSpec((1, D),     lambda b, li, fj: (0, 0)),       # bo
            pl.BlockSpec((D, tf),    lambda b, li, fj: (0, fj)),      # Wf
            pl.BlockSpec((1, tf),    lambda b, li, fj: (0, fj)),      # bf
            pl.BlockSpec((D, tf),    lambda b, li, fj: (0, fj)),      # Wfa
            pl.BlockSpec((1, tf),    lambda b, li, fj: (0, fj)),      # bfa
            pl.BlockSpec((tf, D),    lambda b, li, fj: (fj, 0)),      # Wo
        ],
        out_specs=pl.BlockSpec((1, tl, D), lambda b, li, fj: (b, li, 0)),
        scratch_shapes=[pltpu.VMEM((tl, D), jnp.bfloat16)],   # cached normalized x
        compiler_params=pltpu.CompilerParams(
            dimension_semantics=("parallel", "parallel", "arbitrary"),
            vmem_limit_bytes=vmem_limit),
    )(x2, wnf, bo, wf, bf_, wfa, bfa, wo)
    return out


# --------------------------------------------------------------------------
# Deterministic parameter init (matches the module's shapes / init scheme)
# --------------------------------------------------------------------------
def init_params(key, D, H, F):
    I = D // H
    ks = jax.random.split(key, 16)

    def xavier(k, out_dim, in_dim, gain):
        std = gain * np.sqrt(2.0 / (in_dim + out_dim))
        return std * jax.random.normal(k, (out_dim, in_dim), jnp.float32)

    p = {}
    p["Wz"] = xavier(ks[0], D, D, 0.01);  p["bz"] = jnp.zeros((D,), jnp.float32)
    p["Wza"] = xavier(ks[1], D, D, 0.01); p["bza"] = jnp.zeros((D,), jnp.float32)
    p["Wy"] = xavier(ks[2], D, D, 0.01);  p["by"] = jnp.zeros((D,), jnp.float32)
    p["Wya"] = xavier(ks[3], D, D, 0.01); p["bya"] = jnp.zeros((D,), jnp.float32)
    p["Wdt"] = xavier(ks[4], H, D, 0.01)
    dt = jnp.exp(jax.random.uniform(ks[5], (H,), jnp.float32,
                                    minval=np.log(0.001), maxval=np.log(0.1)))
    p["bdt"] = dt + jnp.log(1.0 - jnp.exp(-dt))            # inverse softplus
    p["ln_a"] = jnp.log(jax.random.uniform(ks[6], (H,), jnp.float32,
                                           minval=1.0, maxval=16.0))
    p["gn_g"] = jnp.ones((H,), jnp.float32)
    p["gn_b"] = jnp.zeros((H,), jnp.float32)
    p["h_init"] = jax.random.normal(ks[7], (H, I), jnp.float32)
    p["w_ns"] = jnp.ones((D,), jnp.float32)
    p["w_nf"] = jnp.ones((D,), jnp.float32)
    p["Wf"] = 0.1 * jax.random.normal(ks[8], (F, D), jnp.float32)
    p["bf"] = 0.05 * jax.random.normal(ks[9], (F,), jnp.float32)
    p["Wfa"] = 0.1 * jax.random.normal(ks[10], (F, D), jnp.float32)
    p["bfa"] = 0.05 * jax.random.normal(ks[11], (F,), jnp.float32)
    p["Wo"] = 0.07 * jax.random.normal(ks[12], (D, F), jnp.float32)
    p["bo"] = 0.05 * jax.random.normal(ks[13], (D,), jnp.float32)
    return p


# --------------------------------------------------------------------------
# Pure-JAX f32 reference (literal translation of the PyTorch forward)
# --------------------------------------------------------------------------
def _silu_ref(x):
    return x * (1.0 / (1.0 + jnp.exp(-x)))


def ref_forward(x, p, chunk_size):
    B, L, D = x.shape
    H = p["ln_a"].shape[0]
    I = D // H

    def rms(v, w):
        return v * jax.lax.rsqrt(jnp.mean(v * v, axis=-1, keepdims=True) + 1e-6) * w

    def softplus(v):
        return jnp.maximum(v, 0.0) + jnp.log1p(jnp.exp(-jnp.abs(v)))

    xn_all = rms(x, p["w_ns"])
    hidden = jnp.broadcast_to(p["h_init"][None], (B, H, I))
    outs = []
    for c0 in range(0, L, chunk_size):
        xc = xn_all[:, c0:c0 + chunk_size]
        x0c = x[:, c0:c0 + chunk_size]
        C = xc.shape[1]
        z = ((xc @ p["Wz"].T + p["bz"]) *
             _silu_ref(xc @ p["Wza"].T + p["bza"])).reshape(B, C, H, I)
        ln_da = -jnp.exp(p["ln_a"]) * softplus(xc @ p["Wdt"].T + p["bdt"])   # (B,C,H)
        lm = jnp.broadcast_to(jnp.transpose(ln_da, (0, 2, 1))[:, :, :, None],
                              (B, H, C, C))
        lm = lm * jnp.tril(jnp.ones((C, C), jnp.float32), -1)
        A = jnp.exp(jnp.cumsum(lm, axis=2)) * jnp.tril(jnp.ones((C, C), jnp.float32))
        h_inner = jnp.einsum("bhlm,bmhi->blhi", A, z)
        cc = jnp.cumsum(ln_da, axis=1)
        h_cross = jnp.einsum("blh,bhi->blhi", jnp.exp(cc), hidden)
        h = h_inner + h_cross
        hidden = h[:, -1]
        mu = jnp.mean(h, axis=-1, keepdims=True)
        var = jnp.mean((h - mu) ** 2, axis=-1, keepdims=True)
        hn = (h - mu) * jax.lax.rsqrt(var + 1e-5)
        hn = hn * p["gn_g"][None, None, :, None] + p["gn_b"][None, None, :, None]
        hn = hn.reshape(B, C, D)
        y = (hn @ p["Wy"].T + p["by"]) * _silu_ref(xc @ p["Wya"].T + p["bya"])
        outs.append(y + x0c)
    x2 = jnp.concatenate(outs, axis=1)
    xn2 = rms(x2, p["w_nf"])
    u = (xn2 @ p["Wf"].T + p["bf"]) * _silu_ref(xn2 @ p["Wfa"].T + p["bfa"])
    return u @ p["Wo"].T + p["bo"] + x2


if __name__ == "__main__":
    B, L, D, H, F, CHUNK = 2, 16, 32, 4, 256, 8
    key = jax.random.PRNGKey(0)
    kp, kx = jax.random.split(key)
    params = init_params(kp, D, H, F)
    x = jax.random.normal(kx, (B, L, D), jnp.float32)

    out = sconv_block_forward(x, params, CHUNK)
    out = jax.block_until_ready(out)

    ref = ref_forward(x, params, CHUNK)
    # bf16 matmul operands + approx reciprocal in SiLU -> relaxed tolerance.
    np.testing.assert_allclose(np.asarray(out), np.asarray(ref), rtol=2e-2, atol=2e-2)
    print("KERNEL_OK")
</pallas_src>

<mosaic_0001>
module attributes {stable_mosaic.version = 11 : i64} {
  func.func @_sconv_chunk_kernel(%arg0: i32, %arg1: i32, %arg2: memref<1x8x32xf32, #tpu.memory_space<vmem>>, %arg3: memref<32x100xbf16, #tpu.memory_space<vmem>>, %arg4: memref<1x100xf32, #tpu.memory_space<vmem>>, %arg5: memref<4x32xf32, #tpu.memory_space<vmem>>, %arg6: memref<1x4xf32, #tpu.memory_space<vmem>>, %arg7: memref<32x4xf32, #tpu.memory_space<vmem>>, %arg8: memref<4x32xf32, #tpu.memory_space<vmem>>, %arg9: memref<32x32xbf16, #tpu.memory_space<vmem>>, %arg10: memref<1x32xf32, #tpu.memory_space<vmem>>, %arg11: memref<1x8x32xf32, #tpu.memory_space<vmem>>, %arg12: memref<1x32xf32, #tpu.memory_space<vmem>>) attributes {dimension_semantics = [#tpu.dimension_semantics<parallel>, #tpu.dimension_semantics<arbitrary>], iteration_bounds = array<i64: 2, 2>, scalar_prefetch = 0 : i64, scratch_operands = 1 : i64, tpu.core_type = #tpu.core_type<tc>, window_params = [{transform_indices = @transform_0, window_bounds = array<i64: 1, 8, 32>}, {pipeline_mode = #tpu.pipeline_mode<synchronous>, transform_indices = @transform_1, window_bounds = array<i64: 32, 100>}, {pipeline_mode = #tpu.pipeline_mode<synchronous>, transform_indices = @transform_2, window_bounds = array<i64: 1, 100>}, {pipeline_mode = #tpu.pipeline_mode<synchronous>, transform_indices = @transform_3, window_bounds = array<i64: 4, 32>}, {pipeline_mode = #tpu.pipeline_mode<synchronous>, transform_indices = @transform_4, window_bounds = array<i64: 1, 4>}, {pipeline_mode = #tpu.pipeline_mode<synchronous>, transform_indices = @transform_5, window_bounds = array<i64: 32, 4>}, {pipeline_mode = #tpu.pipeline_mode<synchronous>, transform_indices = @transform_6, window_bounds = array<i64: 4, 32>}, {pipeline_mode = #tpu.pipeline_mode<synchronous>, transform_indices = @transform_7, window_bounds = array<i64: 32, 32>}, {pipeline_mode = #tpu.pipeline_mode<synchronous>, transform_indices = @transform_8, window_bounds = array<i64: 1, 32>}, {transform_indices = @transform_9, window_bounds = array<i64: 1, 8, 32>}]} {
    %c0_i32 = arith.constant 0 : i32
    %0 = arith.cmpi eq, %arg1, %c0_i32 : i32
    %1 = arith.extui %0 : i1 to i32
    %c0_i32_0 = arith.constant 0 : i32
    %2 = arith.cmpi ne, %1, %c0_i32_0 : i32
    scf.if %2 {
      %c0_48 = arith.constant 0 : index
      %c0_49 = arith.constant 0 : index
      %123 = vector.load %arg10[%c0_48, %c0_49] : memref<1x32xf32, #tpu.memory_space<vmem>>, vector<1x32xf32>
      %c0_50 = arith.constant 0 : index
      %c0_51 = arith.constant 0 : index
      %124 = vector.load %arg12[%c0_50, %c0_51] : memref<1x32xf32, #tpu.memory_space<vmem>>, vector<1x32xf32>
      tpu.vector_store %arg12[%c0_50, %c0_51], %123 {strides = array<i32>} : memref<1x32xf32, #tpu.memory_space<vmem>>, vector<1x32xf32>,
    } else {
    }
    %c0 = arith.constant 0 : index
    %c0_1 = arith.constant 0 : index
    %c0_2 = arith.constant 0 : index
    %3 = vector.load %arg2[%c0, %c0_1, %c0_2] : memref<1x8x32xf32, #tpu.memory_space<vmem>>, vector<1x8x32xf32>
    %4 = vector.shape_cast %3 : vector<1x8x32xf32> to vector<8x32xf32>
    %5 = tpu.iota {dimensions = array<i32: 0>} : vector<8x8xi32>
    %6 = tpu.iota {dimensions = array<i32: 1>} : vector<8x8xi32>
    %7 = arith.cmpi sle, %6, %5 : vector<8x8xi32>
    %8 = arith.extui %7 : vector<8x8xi1> to vector<8x8xi32>
    %9 = arith.sitofp %8 : vector<8x8xi32> to vector<8x8xf32>
    %c0_3 = arith.constant 0 : index
    %c0_4 = arith.constant 0 : index
    %10 = vector.load %arg5[%c0_3, %c0_4] : memref<4x32xf32, #tpu.memory_space<vmem>>, vector<4x32xf32>
    %11 = vector.extract_strided_slice %10 {offsets = [0, 0], sizes = [1, 32], strides = [1, 1]} : vector<4x32xf32> to vector<1x32xf32>
    %12 = vector.extract_strided_slice %10 {offsets = [1, 0], sizes = [1, 32], strides = [1, 1]} : vector<4x32xf32> to vector<1x32xf32>
    %13 = vector.extract_strided_slice %10 {offsets = [2, 0], sizes = [1, 32], strides = [1, 1]} : vector<4x32xf32> to vector<1x32xf32>
    %14 = vector.extract_strided_slice %10 {offsets = [3, 0], sizes = [1, 32], strides = [1, 1]} : vector<4x32xf32> to vector<1x32xf32>
    %15 = arith.mulf %4, %4 : vector<8x32xf32>
    %cst = arith.constant dense<0.000000e+00> : vector<8xf32>
    %16 = vector.multi_reduction <add>, %15, %cst [1] : vector<8x32xf32> to vector<8xf32>
    %17 = vector.shape_cast %16 : vector<8xf32> to vector<8x1xf32>
    %cst_5 = arith.constant 3.200000e+01 : f32
    %18 = vector.broadcast %cst_5 : f32 to vector<8x1xf32>
    %19 = arith.divf %17, %18 : vector<8x1xf32>
    %cst_6 = arith.constant 9.99999997E-7 : f32
    %20 = vector.broadcast %cst_6 : f32 to vector<8x1xf32>
    %21 = arith.addf %19, %20 : vector<8x1xf32>
    %22 = math.rsqrt %21 : vector<8x1xf32>
    %23 = vector.broadcast %22 : vector<8x1xf32> to vector<8x32xf32>
    %24 = arith.mulf %4, %23 : vector<8x32xf32>
    %25 = vector.broadcast %11 : vector<1x32xf32> to vector<8x32xf32>
    %26 = arith.mulf %24, %25 : vector<8x32xf32>
    %27 = arith.truncf %26 : vector<8x32xf32> to vector<8x32xbf16>
    %c0_7 = arith.constant 0 : index
    %c0_8 = arith.constant 0 : index
    %28 = vector.load %arg3[%c0_7, %c0_8] : memref<32x100xbf16, #tpu.memory_space<vmem>>, vector<32x100xbf16>
    %cst_9 = arith.constant dense<0.000000e+00> : vector<8x100xf32>
    %29 = tpu.matmul %27, %28, %cst_9 {dimension_numbers = #tpu.dot_dimension_numbers<[1], [0], [0], [1], [0, 0, 1, 1], [], []>} : vector<8x32xbf16>, vector<32x100xbf16>, vector<8x100xf32> -> vector<8x100xf32>
    %c0_10 = arith.constant 0 : index
    %c0_11 = arith.constant 0 : index
    %30 = vector.load %arg4[%c0_10, %c0_11] : memref<1x100xf32, #tpu.memory_space<vmem>>, vector<1x100xf32>
    %31 = vector.broadcast %30 : vector<1x100xf32> to vector<8x100xf32>
    %32 = arith.addf %29, %31 : vector<8x100xf32>
    %33 = vector.extract_strided_slice %32 {offsets = [0, 0], sizes = [8, 32], strides = [1, 1]} : vector<8x100xf32> to vector<8x32xf32>
    %34 = vector.extract_strided_slice %32 {offsets = [0, 32], sizes = [8, 32], strides = [1, 1]} : vector<8x100xf32> to vector<8x32xf32>
    %35 = vector.extract_strided_slice %32 {offsets = [0, 64], sizes = [8, 32], strides = [1, 1]} : vector<8x100xf32> to vector<8x32xf32>
    %36 = vector.extract_strided_slice %32 {offsets = [0, 96], sizes = [8, 4], strides = [1, 1]} : vector<8x100xf32> to vector<8x4xf32>
    %cst_12 = arith.constant 0.000000e+00 : f32
    %37 = vector.broadcast %cst_12 : f32 to vector<8x32xf32>
    %38 = arith.subf %37, %34 : vector<8x32xf32>
    %39 = math.exp %38 : vector<8x32xf32>
    %cst_13 = arith.constant 1.000000e+00 : f32
    %40 = vector.broadcast %cst_13 : f32 to vector<8x32xf32>
    %41 = arith.addf %40, %39 : vector<8x32xf32>
    %42 = tpu.reciprocal %41 {approx = true} : vector<8x32xf32> -> vector<8x32xf32>
    %43 = arith.mulf %34, %42 : vector<8x32xf32>
    %44 = arith.mulf %33, %43 : vector<8x32xf32>
    %c0_14 = arith.constant 0 : index
    %c0_15 = arith.constant 0 : index
    %45 = vector.load %arg6[%c0_14, %c0_15] : memref<1x4xf32, #tpu.memory_space<vmem>>, vector<1x4xf32>
    %46 = math.exp %45 : vector<1x4xf32>
    %cst_16 = arith.constant 0.000000e+00 : f32
    %47 = vector.broadcast %cst_16 : f32 to vector<1x4xf32>
    %48 = arith.subf %47, %46 : vector<1x4xf32>
    %cst_17 = arith.constant 0.000000e+00 : f32
    %49 = vector.broadcast %cst_17 : f32 to vector<8x4xf32>
    %50 = arith.maximumf %36, %49 : vector<8x4xf32>
    %51 = math.absf %36 : vector<8x4xf32>
    %cst_18 = arith.constant 0.000000e+00 : f32
    %52 = vector.broadcast %cst_18 : f32 to vector<8x4xf32>
    %53 = arith.subf %52, %51 : vector<8x4xf32>
    %54 = math.exp %53 : vector<8x4xf32>
    %55 = math.log1p %54 : vector<8x4xf32>
    %56 = arith.addf %50, %55 : vector<8x4xf32>
    %57 = vector.broadcast %48 : vector<1x4xf32> to vector<8x4xf32>
    %58 = arith.mulf %57, %56 : vector<8x4xf32>
    %cst_19 = arith.constant dense<0.000000e+00> : vector<8x4xf32>
    %59 = tpu.matmul %9, %58, %cst_19 {dimension_numbers = #tpu.dot_dimension_numbers<[1], [0], [0], [1], [0, 0, 1, 1], [], []>} : vector<8x8xf32>, vector<8x4xf32>, vector<8x4xf32> -> vector<8x4xf32>
    %c0_20 = arith.constant 0 : index
    %c0_21 = arith.constant 0 : index
    %60 = vector.load %arg8[%c0_20, %c0_21] : memref<4x32xf32, #tpu.memory_space<vmem>>, vector<4x32xf32>
    %61 = vector.extract_strided_slice %59 {offsets = [0, 0], sizes = [1, 4], strides = [1, 1]} : vector<8x4xf32> to vector<1x4xf32>
    %62 = vector.extract_strided_slice %59 {offsets = [7, 0], sizes = [1, 4], strides = [1, 1]} : vector<8x4xf32> to vector<1x4xf32>
    %63 = arith.addf %61, %62 : vector<1x4xf32>
    %cst_22 = arith.constant 5.000000e-01 : f32
    %64 = vector.broadcast %cst_22 : f32 to vector<1x4xf32>
    %65 = arith.mulf %64, %63 : vector<1x4xf32>
    %66 = vector.broadcast %65 : vector<1x4xf32> to vector<8x4xf32>
    %67 = arith.subf %59, %66 : vector<8x4xf32>
    %68 = math.exp %67 : vector<8x4xf32>
    %cst_23 = arith.constant dense<0.000000e+00> : vector<8x32xf32>
    %69 = tpu.matmul %68, %60, %cst_23 {dimension_numbers = #tpu.dot_dimension_numbers<[1], [0], [0], [1], [0, 0, 1, 1], [], []>} : vector<8x4xf32>, vector<4x32xf32>, vector<8x32xf32> -> vector<8x32xf32>
    %70 = vector.broadcast %65 : vector<1x4xf32> to vector<8x4xf32>
    %71 = arith.subf %70, %59 : vector<8x4xf32>
    %72 = math.exp %71 : vector<8x4xf32>
    %cst_24 = arith.constant dense<0.000000e+00> : vector<8x32xf32>
    %73 = tpu.matmul %72, %60, %cst_24 {dimension_numbers = #tpu.dot_dimension_numbers<[1], [0], [0], [1], [0, 0, 1, 1], [], []>} : vector<8x4xf32>, vector<4x32xf32>, vector<8x32xf32> -> vector<8x32xf32>
    %74 = arith.truncf %9 : vector<8x8xf32> to vector<8x8xbf16>
    %75 = arith.mulf %73, %44 : vector<8x32xf32>
    %76 = arith.truncf %75 : vector<8x32xf32> to vector<8x32xbf16>
    %cst_25 = arith.constant dense<0.000000e+00> : vector<8x32xf32>
    %77 = tpu.matmul %74, %76, %cst_25 {dimension_numbers = #tpu.dot_dimension_numbers<[1], [0], [0], [1], [0, 0, 1, 1], [], []>} : vector<8x8xbf16>, vector<8x32xbf16>, vector<8x32xf32> -> vector<8x32xf32>
    %78 = arith.mulf %69, %77 : vector<8x32xf32>
    %79 = math.exp %59 : vector<8x4xf32>
    %cst_26 = arith.constant dense<0.000000e+00> : vector<8x32xf32>
    %80 = tpu.matmul %79, %60, %cst_26 {dimension_numbers = #tpu.dot_dimension_numbers<[1], [0], [0], [1], [0, 0, 1, 1], [], []>} : vector<8x4xf32>, vector<4x32xf32>, vector<8x32xf32> -> vector<8x32xf32>
    %c0_27 = arith.constant 0 : index
    %c0_28 = arith.constant 0 : index
    %81 = vector.load %arg12[%c0_27, %c0_28] : memref<1x32xf32, #tpu.memory_space<vmem>>, vector<1x32xf32>
    %82 = vector.broadcast %81 : vector<1x32xf32> to vector<8x32xf32>
    %83 = arith.mulf %80, %82 : vector<8x32xf32>
    %84 = arith.addf %78, %83 : vector<8x32xf32>
    %85 = vector.extract_strided_slice %84 {offsets = [7, 0], sizes = [1, 32], strides = [1, 1]} : vector<8x32xf32> to vector<1x32xf32>
    %c0_29 = arith.constant 0 : index
    %c0_30 = arith.constant 0 : index
    %86 = vector.load %arg12[%c0_29, %c0_30] : memref<1x32xf32, #tpu.memory_space<vmem>>, vector<1x32xf32>
    tpu.vector_store %arg12[%c0_29, %c0_30], %85 {strides = array<i32>} : memref<1x32xf32, #tpu.memory_space<vmem>>, vector<1x32xf32>,
    %c0_31 = arith.constant 0 : index
    %c0_32 = arith.constant 0 : index
    %87 = vector.load %arg7[%c0_31, %c0_32] : memref<32x4xf32, #tpu.memory_space<vmem>>, vector<32x4xf32>
    %cst_33 = arith.constant dense<0.000000e+00> : vector<8x4xf32>
    %88 = tpu.matmul %84, %87, %cst_33 {dimension_numbers = #tpu.dot_dimension_numbers<[1], [0], [0], [1], [0, 0, 1, 1], [], []>} : vector<8x32xf32>, vector<32x4xf32>, vector<8x4xf32> -> vector<8x4xf32>
    %cst_34 = arith.constant 1.250000e-01 : f32
    %89 = vector.broadcast %cst_34 : f32 to vector<8x4xf32>
    %90 = arith.mulf %88, %89 : vector<8x4xf32>
    %cst_35 = arith.constant dense<0.000000e+00> : vector<8x32xf32>
    %91 = tpu.matmul %90, %60, %cst_35 {dimension_numbers = #tpu.dot_dimension_numbers<[1], [0], [0], [1], [0, 0, 1, 1], [], []>} : vector<8x4xf32>, vector<4x32xf32>, vector<8x32xf32> -> vector<8x32xf32>
    %92 = arith.subf %84, %91 : vector<8x32xf32>
    %93 = arith.mulf %92, %92 : vector<8x32xf32>
    %cst_36 = arith.constant dense<0.000000e+00> : vector<8x4xf32>
    %94 = tpu.matmul %93, %87, %cst_36 {dimension_numbers = #tpu.dot_dimension_numbers<[1], [0], [0], [1], [0, 0, 1, 1], [], []>} : vector<8x32xf32>, vector<32x4xf32>, vector<8x4xf32> -> vector<8x4xf32>
    %cst_37 = arith.constant 1.250000e-01 : f32
    %95 = vector.broadcast %cst_37 : f32 to vector<8x4xf32>
    %96 = arith.mulf %94, %95 : vector<8x4xf32>
    %cst_38 = arith.constant dense<0.000000e+00> : vector<8x32xf32>
    %97 = tpu.matmul %96, %60, %cst_38 {dimension_numbers = #tpu.dot_dimension_numbers<[1], [0], [0], [1], [0, 0, 1, 1], [], []>} : vector<8x4xf32>, vector<4x32xf32>, vector<8x32xf32> -> vector<8x32xf32>
    %cst_39 = arith.constant 9.99999974E-6 : f32
    %98 = vector.broadcast %cst_39 : f32 to vector<8x32xf32>
    %99 = arith.addf %97, %98 : vector<8x32xf32>
    %100 = math.rsqrt %99 : vector<8x32xf32>
    %101 = arith.mulf %92, %100 : vector<8x32xf32>
    %102 = vector.broadcast %12 : vector<1x32xf32> to vector<8x32xf32>
    %103 = arith.mulf %101, %102 : vector<8x32xf32>
    %104 = vector.broadcast %13 : vector<1x32xf32> to vector<8x32xf32>
    %105 = arith.addf %103, %104 : vector<8x32xf32>
    %106 = arith.truncf %105 : vector<8x32xf32> to vector<8x32xbf16>
    %c0_40 = arith.constant 0 : index
    %c0_41 = arith.constant 0 : index
    %107 = vector.load %arg9[%c0_40, %c0_41] : memref<32x32xbf16, #tpu.memory_space<vmem>>, vector<32x32xbf16>
    %cst_42 = arith.constant dense<0.000000e+00> : vector<8x32xf32>
    %108 = tpu.matmul %106, %107, %cst_42 {dimension_numbers = #tpu.dot_dimension_numbers<[1], [0], [0], [1], [0, 0, 1, 1], [], []>} : vector<8x32xbf16>, vector<32x32xbf16>, vector<8x32xf32> -> vector<8x32xf32>
    %109 = vector.broadcast %14 : vector<1x32xf32> to vector<8x32xf32>
    %110 = arith.addf %108, %109 : vector<8x32xf32>
    %cst_43 = arith.constant 0.000000e+00 : f32
    %111 = vector.broadcast %cst_43 : f32 to vector<8x32xf32>
    %112 = arith.subf %111, %35 : vector<8x32xf32>
    %113 = math.exp %112 : vector<8x32xf32>
    %cst_44 = arith.constant 1.000000e+00 : f32
    %114 = vector.broadcast %cst_44 : f32 to vector<8x32xf32>
    %115 = arith.addf %114, %113 : vector<8x32xf32>
    %116 = tpu.reciprocal %115 {approx = true} : vector<8x32xf32> -> vector<8x32xf32>
    %117 = arith.mulf %35, %116 : vector<8x32xf32>
    %118 = arith.mulf %110, %117 : vector<8x32xf32>
    %119 = arith.addf %118, %4 : vector<8x32xf32>
    %c0_45 = arith.constant 0 : index
    %c0_46 = arith.constant 0 : index
    %c0_47 = arith.constant 0 : index
    %120 = vector.load %arg11[%c0_45, %c0_46, %c0_47] : memref<1x8x32xf32, #tpu.memory_space<vmem>>, vector<1x8x32xf32>
    %121 = vector.shape_cast %120 : vector<1x8x32xf32> to vector<8x32xf32>
    %122 = vector.shape_cast %119 : vector<8x32xf32> to vector<1x8x32xf32>
    tpu.vector_store %arg11[%c0_45, %c0_46, %c0_47], %122 {strides = array<i32>} : memref<1x8x32xf32, #tpu.memory_space<vmem>>, vector<1x8x32xf32>,
    return
  }
  func.func @transform_0(%arg0: i32, %arg1: i32) -> (i32, i32, i32) {
    %c0_i32 = arith.constant 0 : i32
    %c0_i32_0 = arith.constant 0 : i32
    return %arg0, %arg1, %c0_i32 : i32, i32, i32
  }
  func.func @transform_1(%arg0: i32, %arg1: i32) -> (i32, i32) {
    %c0_i32 = arith.constant 0 : i32
    %c0_i32_0 = arith.constant 0 : i32
    %c0_i32_1 = arith.constant 0 : i32
    return %c0_i32, %c0_i32_0 : i32, i32
  }
  func.func @transform_2(%arg0: i32, %arg1: i32) -> (i32, i32) {
    %c0_i32 = arith.constant 0 : i32
    %c0_i32_0 = arith.constant 0 : i32
    %c0_i32_1 = arith.constant 0 : i32
    return %c0_i32, %c0_i32_0 : i32, i32
  }
  func.func @transform_3(%arg0: i32, %arg1: i32) -> (i32, i32) {
    %c0_i32 = arith.constant 0 : i32
    %c0_i32_0 = arith.constant 0 : i32
    %c0_i32_1 = arith.constant 0 : i32
    return %c0_i32, %c0_i32_0 : i32, i32
  }
  func.func @transform_4(%arg0: i32, %arg1: i32) -> (i32, i32) {
    %c0_i32 = arith.constant 0 : i32
    %c0_i32_0 = arith.constant 0 : i32
    %c0_i32_1 = arith.constant 0 : i32
    return %c0_i32, %c0_i32_0 : i32, i32
  }
  func.func @transform_5(%arg0: i32, %arg1: i32) -> (i32, i32) {
    %c0_i32 = arith.constant 0 : i32
    %c0_i32_0 = arith.constant 0 : i32
    %c0_i32_1 = arith.constant 0 : i32
    return %c0_i32, %c0_i32_0 : i32, i32
  }
  func.func @transform_6(%arg0: i32, %arg1: i32) -> (i32, i32) {
    %c0_i32 = arith.constant 0 : i32
    %c0_i32_0 = arith.constant 0 : i32
    %c0_i32_1 = arith.constant 0 : i32
    return %c0_i32, %c0_i32_0 : i32, i32
  }
  func.func @transform_7(%arg0: i32, %arg1: i32) -> (i32, i32) {
    %c0_i32 = arith.constant 0 : i32
    %c0_i32_0 = arith.constant 0 : i32
    %c0_i32_1 = arith.constant 0 : i32
    return %c0_i32, %c0_i32_0 : i32, i32
  }
  func.func @transform_8(%arg0: i32, %arg1: i32) -> (i32, i32) {
    %c0_i32 = arith.constant 0 : i32
    %c0_i32_0 = arith.constant 0 : i32
    %c0_i32_1 = arith.constant 0 : i32
    return %c0_i32, %c0_i32_0 : i32, i32
  }
  func.func @transform_9(%arg0: i32, %arg1: i32) -> (i32, i32, i32) {
    %c0_i32 = arith.constant 0 : i32
    %c0_i32_0 = arith.constant 0 : i32
    return %arg0, %arg1, %c0_i32 : i32, i32, i32
  }
}

module attributes {stable_mosaic.version = 11 : i64} {
  func.func @_sconv_chunk_kernel(%arg0: i32, %arg1: i32, %arg2: memref<1x8x32xf32, #tpu.memory_space<vmem>>, %arg3: memref<32x100xbf16, #tpu.memory_space<vmem>>, %arg4: memref<1x100xf32, #tpu.memory_space<vmem>>, %arg5: memref<4x32xf32, #tpu.memory_space<vmem>>, %arg6: memref<1x4xf32, #tpu.memory_space<vmem>>, %arg7: memref<32x4xf32, #tpu.memory_space<vmem>>, %arg8: memref<4x32xf32, #tpu.memory_space<vmem>>, %arg9: memref<32x32xbf16, #tpu.memory_space<vmem>>, %arg10: memref<1x32xf32, #tpu.memory_space<vmem>>, %arg11: memref<1x8x32xf32, #tpu.memory_space<vmem>>, %arg12: memref<1x32xf32, #tpu.memory_space<vmem>>) attributes {dimension_semantics = [#tpu.dimension_semantics<parallel>, #tpu.dimension_semantics<arbitrary>], iteration_bounds = array<i64: 2, 2>, scalar_prefetch = 0 : i64, scratch_operands = 1 : i64, tpu.core_type = #tpu.core_type<tc>, window_params = [{transform_indices = @transform_0, window_bounds = array<i64: 1, 8, 32>}, {pipeline_mode = #tpu.pipeline_mode<synchronous>, transform_indices = @transform_1, window_bounds = array<i64: 32, 100>}, {pipeline_mode = #tpu.pipeline_mode<synchronous>, transform_indices = @transform_2, window_bounds = array<i64: 1, 100>}, {pipeline_mode = #tpu.pipeline_mode<synchronous>, transform_indices = @transform_3, window_bounds = array<i64: 4, 32>}, {pipeline_mode = #tpu.pipeline_mode<synchronous>, transform_indices = @transform_4, window_bounds = array<i64: 1, 4>}, {pipeline_mode = #tpu.pipeline_mode<synchronous>, transform_indices = @transform_5, window_bounds = array<i64: 32, 4>}, {pipeline_mode = #tpu.pipeline_mode<synchronous>, transform_indices = @transform_6, window_bounds = array<i64: 4, 32>}, {pipeline_mode = #tpu.pipeline_mode<synchronous>, transform_indices = @transform_7, window_bounds = array<i64: 32, 32>}, {pipeline_mode = #tpu.pipeline_mode<synchronous>, transform_indices = @transform_8, window_bounds = array<i64: 1, 32>}, {transform_indices = @transform_9, window_bounds = array<i64: 1, 8, 32>}]} {
    %c0_i32 = arith.constant 0 : i32
    %0 = arith.cmpi eq, %arg1, %c0_i32 : i32
    %1 = arith.extui %0 : i1 to i32
    %c0_i32_0 = arith.constant 0 : i32
    %2 = arith.cmpi ne, %1, %c0_i32_0 : i32
    scf.if %2 {
      %c0_48 = arith.constant 0 : index
      %c0_49 = arith.constant 0 : index
      %123 = vector.load %arg10[%c0_48, %c0_49] : memref<1x32xf32, #tpu.memory_space<vmem>>, vector<1x32xf32>
      %c0_50 = arith.constant 0 : index
      %c0_51 = arith.constant 0 : index
      %124 = vector.load %arg12[%c0_50, %c0_51] : memref<1x32xf32, #tpu.memory_space<vmem>>, vector<1x32xf32>
      tpu.vector_store %arg12[%c0_50, %c0_51], %123 {strides = array<i32>} : memref<1x32xf32, #tpu.memory_space<vmem>>, vector<1x32xf32>,
    } else {
    }
    %c0 = arith.constant 0 : index
    %c0_1 = arith.constant 0 : index
    %c0_2 = arith.constant 0 : index
    %3 = vector.load %arg2[%c0, %c0_1, %c0_2] : memref<1x8x32xf32, #tpu.memory_space<vmem>>, vector<1x8x32xf32>
    %4 = vector.shape_cast %3 : vector<1x8x32xf32> to vector<8x32xf32>
    %5 = tpu.iota {dimensions = array<i32: 0>} : vector<8x8xi32>
    %6 = tpu.iota {dimensions = array<i32: 1>} : vector<8x8xi32>
    %7 = arith.cmpi sle, %6, %5 : vector<8x8xi32>
    %8 = arith.extui %7 : vector<8x8xi1> to vector<8x8xi32>
    %9 = arith.sitofp %8 : vector<8x8xi32> to vector<8x8xf32>
    %c0_3 = arith.constant 0 : index
    %c0_4 = arith.constant 0 : index
    %10 = vector.load %arg5[%c0_3, %c0_4] : memref<4x32xf32, #tpu.memory_space<vmem>>, vector<4x32xf32>
    %11 = vector.extract_strided_slice %10 {offsets = [0, 0], sizes = [1, 32], strides = [1, 1]} : vector<4x32xf32> to vector<1x32xf32>
    %12 = vector.extract_strided_slice %10 {offsets = [1, 0], sizes = [1, 32], strides = [1, 1]} : vector<4x32xf32> to vector<1x32xf32>
    %13 = vector.extract_strided_slice %10 {offsets = [2, 0], sizes = [1, 32], strides = [1, 1]} : vector<4x32xf32> to vector<1x32xf32>
    %14 = vector.extract_strided_slice %10 {offsets = [3, 0], sizes = [1, 32], strides = [1, 1]} : vector<4x32xf32> to vector<1x32xf32>
    %15 = arith.mulf %4, %4 : vector<8x32xf32>
    %cst = arith.constant dense<0.000000e+00> : vector<8xf32>
    %16 = vector.multi_reduction <add>, %15, %cst [1] : vector<8x32xf32> to vector<8xf32>
    %17 = vector.shape_cast %16 : vector<8xf32> to vector<8x1xf32>
    %cst_5 = arith.constant 3.200000e+01 : f32
    %18 = vector.broadcast %cst_5 : f32 to vector<8x1xf32>
    %19 = arith.divf %17, %18 : vector<8x1xf32>
    %cst_6 = arith.constant 9.99999997E-7 : f32
    %20 = vector.broadcast %cst_6 : f32 to vector<8x1xf32>
    %21 = arith.addf %19, %20 : vector<8x1xf32>
    %22 = math.rsqrt %21 : vector<8x1xf32>
    %23 = vector.broadcast %22 : vector<8x1xf32> to vector<8x32xf32>
    %24 = arith.mulf %4, %23 : vector<8x32xf32>
    %25 = vector.broadcast %11 : vector<1x32xf32> to vector<8x32xf32>
    %26 = arith.mulf %24, %25 : vector<8x32xf32>
    %27 = arith.truncf %26 : vector<8x32xf32> to vector<8x32xbf16>
    %c0_7 = arith.constant 0 : index
    %c0_8 = arith.constant 0 : index
    %28 = vector.load %arg3[%c0_7, %c0_8] : memref<32x100xbf16, #tpu.memory_space<vmem>>, vector<32x100xbf16>
    %cst_9 = arith.constant dense<0.000000e+00> : vector<8x100xf32>
    %29 = tpu.matmul %27, %28, %cst_9 {dimension_numbers = #tpu.dot_dimension_numbers<[1], [0], [0], [1], [0, 0, 1, 1], [], []>} : vector<8x32xbf16>, vector<32x100xbf16>, vector<8x100xf32> -> vector<8x100xf32>
    %c0_10 = arith.constant 0 : index
    %c0_11 = arith.constant 0 : index
    %30 = vector.load %arg4[%c0_10, %c0_11] : memref<1x100xf32, #tpu.memory_space<vmem>>, vector<1x100xf32>
    %31 = vector.broadcast %30 : vector<1x100xf32> to vector<8x100xf32>
    %32 = arith.addf %29, %31 : vector<8x100xf32>
    %33 = vector.extract_strided_slice %32 {offsets = [0, 0], sizes = [8, 32], strides = [1, 1]} : vector<8x100xf32> to vector<8x32xf32>
    %34 = vector.extract_strided_slice %32 {offsets = [0, 32], sizes = [8, 32], strides = [1, 1]} : vector<8x100xf32> to vector<8x32xf32>
    %35 = vector.extract_strided_slice %32 {offsets = [0, 64], sizes = [8, 32], strides = [1, 1]} : vector<8x100xf32> to vector<8x32xf32>
    %36 = vector.extract_strided_slice %32 {offsets = [0, 96], sizes = [8, 4], strides = [1, 1]} : vector<8x100xf32> to vector<8x4xf32>
    %cst_12 = arith.constant 0.000000e+00 : f32
    %37 = vector.broadcast %cst_12 : f32 to vector<8x32xf32>
    %38 = arith.subf %37, %34 : vector<8x32xf32>
    %39 = math.exp %38 : vector<8x32xf32>
    %cst_13 = arith.constant 1.000000e+00 : f32
    %40 = vector.broadcast %cst_13 : f32 to vector<8x32xf32>
    %41 = arith.addf %40, %39 : vector<8x32xf32>
    %42 = tpu.reciprocal %41 {approx = true} : vector<8x32xf32> -> vector<8x32xf32>
    %43 = arith.mulf %34, %42 : vector<8x32xf32>
    %44 = arith.mulf %33, %43 : vector<8x32xf32>
    %c0_14 = arith.constant 0 : index
    %c0_15 = arith.constant 0 : index
    %45 = vector.load %arg6[%c0_14, %c0_15] : memref<1x4xf32, #tpu.memory_space<vmem>>, vector<1x4xf32>
    %46 = math.exp %45 : vector<1x4xf32>
    %cst_16 = arith.constant 0.000000e+00 : f32
    %47 = vector.broadcast %cst_16 : f32 to vector<1x4xf32>
    %48 = arith.subf %47, %46 : vector<1x4xf32>
    %cst_17 = arith.constant 0.000000e+00 : f32
    %49 = vector.broadcast %cst_17 : f32 to vector<8x4xf32>
    %50 = arith.maximumf %36, %49 : vector<8x4xf32>
    %51 = math.absf %36 : vector<8x4xf32>
    %cst_18 = arith.constant 0.000000e+00 : f32
    %52 = vector.broadcast %cst_18 : f32 to vector<8x4xf32>
    %53 = arith.subf %52, %51 : vector<8x4xf32>
    %54 = math.exp %53 : vector<8x4xf32>
    %55 = math.log1p %54 : vector<8x4xf32>
    %56 = arith.addf %50, %55 : vector<8x4xf32>
    %57 = vector.broadcast %48 : vector<1x4xf32> to vector<8x4xf32>
    %58 = arith.mulf %57, %56 : vector<8x4xf32>
    %cst_19 = arith.constant dense<0.000000e+00> : vector<8x4xf32>
    %59 = tpu.matmul %9, %58, %cst_19 {dimension_numbers = #tpu.dot_dimension_numbers<[1], [0], [0], [1], [0, 0, 1, 1], [], []>} : vector<8x8xf32>, vector<8x4xf32>, vector<8x4xf32> -> vector<8x4xf32>
    %c0_20 = arith.constant 0 : index
    %c0_21 = arith.constant 0 : index
    %60 = vector.load %arg8[%c0_20, %c0_21] : memref<4x32xf32, #tpu.memory_space<vmem>>, vector<4x32xf32>
    %61 = vector.extract_strided_slice %59 {offsets = [0, 0], sizes = [1, 4], strides = [1, 1]} : vector<8x4xf32> to vector<1x4xf32>
    %62 = vector.extract_strided_slice %59 {offsets = [7, 0], sizes = [1, 4], strides = [1, 1]} : vector<8x4xf32> to vector<1x4xf32>
    %63 = arith.addf %61, %62 : vector<1x4xf32>
    %cst_22 = arith.constant 5.000000e-01 : f32
    %64 = vector.broadcast %cst_22 : f32 to vector<1x4xf32>
    %65 = arith.mulf %64, %63 : vector<1x4xf32>
    %66 = vector.broadcast %65 : vector<1x4xf32> to vector<8x4xf32>
    %67 = arith.subf %59, %66 : vector<8x4xf32>
    %68 = math.exp %67 : vector<8x4xf32>
    %cst_23 = arith.constant dense<0.000000e+00> : vector<8x32xf32>
    %69 = tpu.matmul %68, %60, %cst_23 {dimension_numbers = #tpu.dot_dimension_numbers<[1], [0], [0], [1], [0, 0, 1, 1], [], []>} : vector<8x4xf32>, vector<4x32xf32>, vector<8x32xf32> -> vector<8x32xf32>
    %70 = vector.broadcast %65 : vector<1x4xf32> to vector<8x4xf32>
    %71 = arith.subf %70, %59 : vector<8x4xf32>
    %72 = math.exp %71 : vector<8x4xf32>
    %cst_24 = arith.constant dense<0.000000e+00> : vector<8x32xf32>
    %73 = tpu.matmul %72, %60, %cst_24 {dimension_numbers = #tpu.dot_dimension_numbers<[1], [0], [0], [1], [0, 0, 1, 1], [], []>} : vector<8x4xf32>, vector<4x32xf32>, vector<8x32xf32> -> vector<8x32xf32>
    %74 = arith.truncf %9 : vector<8x8xf32> to vector<8x8xbf16>
    %75 = arith.mulf %73, %44 : vector<8x32xf32>
    %76 = arith.truncf %75 : vector<8x32xf32> to vector<8x32xbf16>
    %cst_25 = arith.constant dense<0.000000e+00> : vector<8x32xf32>
    %77 = tpu.matmul %74, %76, %cst_25 {dimension_numbers = #tpu.dot_dimension_numbers<[1], [0], [0], [1], [0, 0, 1, 1], [], []>} : vector<8x8xbf16>, vector<8x32xbf16>, vector<8x32xf32> -> vector<8x32xf32>
    %78 = arith.mulf %69, %77 : vector<8x32xf32>
    %79 = math.exp %59 : vector<8x4xf32>
    %cst_26 = arith.constant dense<0.000000e+00> : vector<8x32xf32>
    %80 = tpu.matmul %79, %60, %cst_26 {dimension_numbers = #tpu.dot_dimension_numbers<[1], [0], [0], [1], [0, 0, 1, 1], [], []>} : vector<8x4xf32>, vector<4x32xf32>, vector<8x32xf32> -> vector<8x32xf32>
    %c0_27 = arith.constant 0 : index
    %c0_28 = arith.constant 0 : index
    %81 = vector.load %arg12[%c0_27, %c0_28] : memref<1x32xf32, #tpu.memory_space<vmem>>, vector<1x32xf32>
    %82 = vector.broadcast %81 : vector<1x32xf32> to vector<8x32xf32>
    %83 = arith.mulf %80, %82 : vector<8x32xf32>
    %84 = arith.addf %78, %83 : vector<8x32xf32>
    %85 = vector.extract_strided_slice %84 {offsets = [7, 0], sizes = [1, 32], strides = [1, 1]} : vector<8x32xf32> to vector<1x32xf32>
    %c0_29 = arith.constant 0 : index
    %c0_30 = arith.constant 0 : index
    %86 = vector.load %arg12[%c0_29, %c0_30] : memref<1x32xf32, #tpu.memory_space<vmem>>, vector<1x32xf32>
    tpu.vector_store %arg12[%c0_29, %c0_30], %85 {strides = array<i32>} : memref<1x32xf32, #tpu.memory_space<vmem>>, vector<1x32xf32>,
    %c0_31 = arith.constant 0 : index
    %c0_32 = arith.constant 0 : index
    %87 = vector.load %arg7[%c0_31, %c0_32] : memref<32x4xf32, #tpu.memory_space<vmem>>, vector<32x4xf32>
    %cst_33 = arith.constant dense<0.000000e+00> : vector<8x4xf32>
    %88 = tpu.matmul %84, %87, %cst_33 {dimension_numbers = #tpu.dot_dimension_numbers<[1], [0], [0], [1], [0, 0, 1, 1], [], []>} : vector<8x32xf32>, vector<32x4xf32>, vector<8x4xf32> -> vector<8x4xf32>
    %cst_34 = arith.constant 1.250000e-01 : f32
    %89 = vector.broadcast %cst_34 : f32 to vector<8x4xf32>
    %90 = arith.mulf %88, %89 : vector<8x4xf32>
    %cst_35 = arith.constant dense<0.000000e+00> : vector<8x32xf32>
    %91 = tpu.matmul %90, %60, %cst_35 {dimension_numbers = #tpu.dot_dimension_numbers<[1], [0], [0], [1], [0, 0, 1, 1], [], []>} : vector<8x4xf32>, vector<4x32xf32>, vector<8x32xf32> -> vector<8x32xf32>
    %92 = arith.subf %84, %91 : vector<8x32xf32>
    %93 = arith.mulf %92, %92 : vector<8x32xf32>
    %cst_36 = arith.constant dense<0.000000e+00> : vector<8x4xf32>
    %94 = tpu.matmul %93, %87, %cst_36 {dimension_numbers = #tpu.dot_dimension_numbers<[1], [0], [0], [1], [0, 0, 1, 1], [], []>} : vector<8x32xf32>, vector<32x4xf32>, vector<8x4xf32> -> vector<8x4xf32>
    %cst_37 = arith.constant 1.250000e-01 : f32
    %95 = vector.broadcast %cst_37 : f32 to vector<8x4xf32>
    %96 = arith.mulf %94, %95 : vector<8x4xf32>
    %cst_38 = arith.constant dense<0.000000e+00> : vector<8x32xf32>
    %97 = tpu.matmul %96, %60, %cst_38 {dimension_numbers = #tpu.dot_dimension_numbers<[1], [0], [0], [1], [0, 0, 1, 1], [], []>} : vector<8x4xf32>, vector<4x32xf32>, vector<8x32xf32> -> vector<8x32xf32>
    %cst_39 = arith.constant 9.99999974E-6 : f32
    %98 = vector.broadcast %cst_39 : f32 to vector<8x32xf32>
    %99 = arith.addf %97, %98 : vector<8x32xf32>
    %100 = math.rsqrt %99 : vector<8x32xf32>
    %101 = arith.mulf %92, %100 : vector<8x32xf32>
    %102 = vector.broadcast %12 : vector<1x32xf32> to vector<8x32xf32>
    %103 = arith.mulf %101, %102 : vector<8x32xf32>
    %104 = vector.broadcast %13 : vector<1x32xf32> to vector<8x32xf32>
    %105 = arith.addf %103, %104 : vector<8x32xf32>
    %106 = arith.truncf %105 : vector<8x32xf32> to vector<8x32xbf16>
    %c0_40 = arith.constant 0 : index
    %c0_41 = arith.constant 0 : index
    %107 = vector.load %arg9[%c0_40, %c0_41] : memref<32x32xbf16, #tpu.memory_space<vmem>>, vector<32x32xbf16>
    %cst_42 = arith.constant dense<0.000000e+00> : vector<8x32xf32>
    %108 = tpu.matmul %106, %107, %cst_42 {dimension_numbers = #tpu.dot_dimension_numbers<[1], [0], [0], [1], [0, 0, 1, 1], [], []>} : vector<8x32xbf16>, vector<32x32xbf16>, vector<8x32xf32> -> vector<8x32xf32>
    %109 = vector.broadcast %14 : vector<1x32xf32> to vector<8x32xf32>
    %110 = arith.addf %108, %109 : vector<8x32xf32>
    %cst_43 = arith.constant 0.000000e+00 : f32
    %111 = vector.broadcast %cst_43 : f32 to vector<8x32xf32>
    %112 = arith.subf %111, %35 : vector<8x32xf32>
    %113 = math.exp %112 : vector<8x32xf32>
    %cst_44 = arith.constant 1.000000e+00 : f32
    %114 = vector.broadcast %cst_44 : f32 to vector<8x32xf32>
    %115 = arith.addf %114, %113 : vector<8x32xf32>
    %116 = tpu.reciprocal %115 {approx = true} : vector<8x32xf32> -> vector<8x32xf32>
    %117 = arith.mulf %35, %116 : vector<8x32xf32>
    %118 = arith.mulf %110, %117 : vector<8x32xf32>
    %119 = arith.addf %118, %4 : vector<8x32xf32>
    %c0_45 = arith.constant 0 : index
    %c0_46 = arith.constant 0 : index
    %c0_47 = arith.constant 0 : index
    %120 = vector.load %arg11[%c0_45, %c0_46, %c0_47] : memref<1x8x32xf32, #tpu.memory_space<vmem>>, vector<1x8x32xf32>
    %121 = vector.shape_cast %120 : vector<1x8x32xf32> to vector<8x32xf32>
    %122 = vector.shape_cast %119 : vector<8x32xf32> to vector<1x8x32xf32>
    tpu.vector_store %arg11[%c0_45, %c0_46, %c0_47], %122 {strides = array<i32>} : memref<1x8x32xf32, #tpu.memory_space<vmem>>, vector<1x8x32xf32>,
    return
  }
  func.func @transform_0(%arg0: i32, %arg1: i32) -> (i32, i32, i32) {
    %c0_i32 = arith.constant 0 : i32
    %c0_i32_0 = arith.constant 0 : i32
    return %arg0, %arg1, %c0_i32 : i32, i32, i32
  }
  func.func @transform_1(%arg0: i32, %arg1: i32) -> (i32, i32) {
    %c0_i32 = arith.constant 0 : i32
    %c0_i32_0 = arith.constant 0 : i32
    %c0_i32_1 = arith.constant 0 : i32
    return %c0_i32, %c0_i32_0 : i32, i32
  }
  func.func @transform_2(%arg0: i32, %arg1: i32) -> (i32, i32) {
    %c0_i32 = arith.constant 0 : i32
    %c0_i32_0 = arith.constant 0 : i32
    %c0_i32_1 = arith.constant 0 : i32
    return %c0_i32, %c0_i32_0 : i32, i32
  }
  func.func @transform_3(%arg0: i32, %arg1: i32) -> (i32, i32) {
    %c0_i32 = arith.constant 0 : i32
    %c0_i32_0 = arith.constant 0 : i32
    %c0_i32_1 = arith.constant 0 : i32
    return %c0_i32, %c0_i32_0 : i32, i32
  }
  func.func @transform_4(%arg0: i32, %arg1: i32) -> (i32, i32) {
    %c0_i32 = arith.constant 0 : i32
    %c0_i32_0 = arith.constant 0 : i32
    %c0_i32_1 = arith.constant 0 : i32
    return %c0_i32, %c0_i32_0 : i32, i32
  }
  func.func @transform_5(%arg0: i32, %arg1: i32) -> (i32, i32) {
    %c0_i32 = arith.constant 0 : i32
    %c0_i32_0 = arith.constant 0 : i32
    %c0_i32_1 = arith.constant 0 : i32
    return %c0_i32, %c0_i32_0 : i32, i32
  }
  func.func @transform_6(%arg0: i32, %arg1: i32) -> (i32, i32) {
    %c0_i32 = arith.constant 0 : i32
    %c0_i32_0 = arith.constant 0 : i32
    %c0_i32_1 = arith.constant 0 : i32
    return %c0_i32, %c0_i32_0 : i32, i32
  }
  func.func @transform_7(%arg0: i32, %arg1: i32) -> (i32, i32) {
    %c0_i32 = arith.constant 0 : i32
    %c0_i32_0 = arith.constant 0 : i32
    %c0_i32_1 = arith.constant 0 : i32
    return %c0_i32, %c0_i32_0 : i32, i32
  }
  func.func @transform_8(%arg0: i32, %arg1: i32) -> (i32, i32) {
    %c0_i32 = arith.constant 0 : i32
    %c0_i32_0 = arith.constant 0 : i32
    %c0_i32_1 = arith.constant 0 : i32
    return %c0_i32, %c0_i32_0 : i32, i32
  }
  func.func @transform_9(%arg0: i32, %arg1: i32) -> (i32, i32, i32) {
    %c0_i32 = arith.constant 0 : i32
    %c0_i32_0 = arith.constant 0 : i32
    return %arg0, %arg1, %c0_i32 : i32, i32, i32
  }
}

</mosaic_0001>

<llo_original>
// kernel: tpu_custom_call.1
$region0: #{tpu_custom_call.1}
  #allocation0 [shape = 'u32[]', space=smem, size = 0x4, offset = 0x4, fixed_abs, tag = 'smem constant byte address 0x4 - core index']
  #allocation1 [shape = 'u32[72,128]{1,0:T(1,128)}', space=vmem, size = 0x9000, scoped, tag = 'internal scratch']
  #allocation2 [shape = 'f32[1,32]{1,0:T(1,128)}', space=vmem, size = 0x200, scoped, tag = 'scratch operand']
  %s0 = inlined_call_operand.vmem [shape: f32[2,16,32], index: 0, kind: input, shape index: {}]
  %s1 = inlined_call_operand.hbm [shape: bf16[32,100], index: 1, kind: input, shape index: {}]
  %s2 = inlined_call_operand.hbm [shape: f32[1,100], index: 2, kind: input, shape index: {}]
  %s3 = inlined_call_operand.vmem [shape: f32[4,32], index: 3, kind: input, shape index: {}]
  %s4 = inlined_call_operand.hbm [shape: f32[1,4], index: 4, kind: input, shape index: {}]
  %s5 = inlined_call_operand.vmem [shape: f32[32,4], index: 5, kind: input, shape index: {}]
  %s6 = inlined_call_operand.hbm [shape: f32[4,32], index: 6, kind: input, shape index: {}]
  %s7 = inlined_call_operand.hbm [shape: bf16[32,32], index: 7, kind: input, shape index: {}]
  %s8 = inlined_call_operand.vmem [shape: f32[1,32], index: 8, kind: input, shape index: {}]
  %s9 = inlined_call_operand.hbm [shape: f32[2,16,32], index: 9, kind: output, shape index: {}]
  %s10 = sld [smem:[#allocation0]]
  $region93: #{tpu_custom_call.1} parent=0
    _
  %s12 = ssub.s32 1, %s10
  %s13 = scalar_select 0, %s12, %s10
  $region1: #{tpu_custom_call.1} parent=0
    #allocation3 [shape = 'u8[8192]{0}', space=vmem, size = 0x2000, scoped, tag = 'input window, operand 1, single buffered']
    #allocation4 [shape = 's32[2]{0}', space=sflag, size = 0x8, scoped, tag = 'scoped memory for tpu_custom_call.1']
    #allocation5 [shape = 's32[2]{0}', space=sflag, size = 0x8, scoped, tag = 'scoped memory for tpu_custom_call.1']
    #allocation6 [shape = 'u8[512]{0}', space=vmem, size = 0x400, scoped, tag = 'input window, operand 2, single buffered']
    #allocation7 [shape = 's32[1]{0}', space=sflag, size = 0x4, scoped, tag = 'scoped memory for tpu_custom_call.1']
    #allocation8 [shape = 'u8[512]{0}', space=vmem, size = 0x400, scoped, tag = 'input window, operand 4, single buffered']
    #allocation9 [shape = 'u8[2048]{0}', space=vmem, size = 0x800, scoped, tag = 'input window, operand 6, single buffered']
    #allocation10 [shape = 's32[1]{0}', space=sflag, size = 0x4, scoped, tag = 'scoped memory for tpu_custom_call.1']
    #allocation11 [shape = 'u8[8192]{0}', space=vmem, size = 0x2000, scoped, tag = 'input window, operand 7, single buffered']
    #allocation12 [shape = 'u8[8192]{0}', space=vmem, size = 0x2000, scoped, tag = 'output window, operand 0']
    %14 = vsyncpa [#allocation4], 0
    %15 = vsyncpa [#allocation7], 0
    %16 = vsyncpa [#allocation10], 0
    %17 = vsyncpa [#allocation5], 0
    %s18 = scalar_lea.sflag [#allocation5], 1
    %19 = vsyncpa %s18, 0
    loop: start=0, step=1, limit=6
    $region2: #{tpu_custom_call.1} parent=1 // loop_pre_header
      _
    $region3: #{tpu_custom_call.1} parent=1 // loop_header
      %s21 = sphi 0, %s25
      %p22 = scmp.ge.s32.totalorder %s21, 6
      %s28 = sphi 0, %s40
      %s29 = sphi 0, %s36
      %s30 = sphi 0, %s28
      %s31 = sphi 0, %s29
      %s32 = sphi 0, %s30
      %s33 = sphi 0, %s31
      %s45 = sphi 0, %s47
      %s48 = sphi 0, %s45
      %s49 = sphi 0, %s48
      %s65 = sphi 0, %s49
      %s69 = sphi 0, %s69
      %s71 = sphi 0, %s69
      %s72 = sphi 0, %s71
      %s86 = sphi 0, %s72
      %s90 = sphi 0, %s90
      %s92 = sphi 0, %s90
      %s93 = sphi 0, %s92
      %s107 = sphi 0, %s93
      %s111 = sphi 0, %s111
      %s113 = sphi 0, %s111
      %s114 = sphi 0, %s113
      %s128 = sphi 0, %s114
      %s132 = sphi 0, %s132
      %s134 = sphi 0, %s132
      %s135 = sphi 0, %s134
      %s149 = sphi 0, %s135
      %s153 = sphi 0, %s153
      %s155 = sphi 0, %s153
      %s156 = sphi 0, %s155
      %s170 = sphi 0, %s156
      %s174 = sphi 0, %s174
      %s176 = sphi 0, %s174
      %s177 = sphi 0, %s176
      %s191 = sphi 0, %s177
      %s195 = sphi 0, %s195
      %s197 = sphi 0, %s195
      %s198 = sphi 0, %s197
      %s212 = sphi 0, %s198
      %s216 = sphi 0, %s216
      %s218 = sphi 0, %s216
      %s219 = sphi 0, %s218
      %s233 = sphi 0, %s219
      %s241 = sphi 0, %s243
      %s244 = sphi 0, %s241
      %s245 = sphi 0, %s244
      %s261 = sphi 0, %s245
    $region4: #{tpu_custom_call.1} parent=1 // loop_header_branch
      %24 = sbr.rel (%p22) target = $region8
    $region5: #{tpu_custom_call.1} parent=1 // loop_body
      %s26 = ssub.s32 %s21, 1
      %s27 = ssub.s32 %s21, 2
      %s34 = sadd.s32 1, %s29
      %p35 = scmp.ge.s32.totalorder %s34, 2
      %s36 = scalar_select %p35, 0, %s34
      %s37 = sadd.s32 1, %s28
      %s38 = scalar_select %p35, %s37, %s28
      %p39 = scmp.ge.s32.totalorder %s38, 2
      %s40 = scalar_select %p39, 0, %s38
      %s41 = ssub.s32 %s28, %s40
      %s42 = ssub.s32 %s29, %s36
      %s43 = sor.u32 %s41, %s42
      %p44 = scmp.eq.s32.totalorder %s43, 0
      %s46 = sadd.s32 %s45, 1
      %s47 = scalar_select %p44, %s45, %s46
      %p50 = pneg %p44
      %p51 = scmp.eq.s32.totalorder %s21, 3
      %p52 = por %p50, %p51
      %p53 = scmp.ne.s32.totalorder %s45, %s48
      %p54 = scmp.eq.s32.totalorder %s21, 0
      %p55 = por %p53, %p54
      %p56 = scmp.ne.s32.totalorder %s45, %s48
      %p57 = scmp.eq.s32.totalorder %s26, 3
      %p58 = por %p56, %p57
      %p59 = scmp.ne.s32.totalorder %s48, %s49
      %p60 = scmp.eq.s32.totalorder %s26, 0
      %p61 = por %p59, %p60
      %p62 = scmp.ne.s32.totalorder %s48, %s49
      %p63 = scmp.eq.s32.totalorder %s27, 3
      %p64 = por %p62, %p63
      %p66 = scmp.ne.s32.totalorder %s49, %s65
      %p67 = scmp.eq.s32.totalorder %s27, 0
      %p68 = por %p66, %p67
      %s70 = sadd.s32 %s69, 1
      %p73 = scmp.eq.s32.totalorder %s21, 3
      %p74 = scmp.ne.s32.totalorder %s69, %s71
      %p75 = scmp.eq.s32.totalorder %s21, 0
      %p76 = por %p74, %p75
      %p77 = scmp.ne.s32.totalorder %s69, %s71
      %p78 = scmp.eq.s32.totalorder %s26, 3
      %p79 = por %p77, %p78
      %p80 = scmp.ne.s32.totalorder %s71, %s72
      %p81 = scmp.eq.s32.totalorder %s26, 0
      %p82 = por %p80, %p81
      %p83 = scmp.ne.s32.totalorder %s71, %s72
      %p84 = scmp.eq.s32.totalorder %s27, 3
      %p85 = por %p83, %p84
      %p87 = scmp.ne.s32.totalorder %s72, %s86
      %p88 = scmp.eq.s32.totalorder %s27, 0
      %p89 = por %p87, %p88
      %s91 = sadd.s32 %s90, 1
      %p94 = scmp.eq.s32.totalorder %s21, 3
      %p95 = scmp.ne.s32.totalorder %s90, %s92
      %p96 = scmp.eq.s32.totalorder %s21, 0
      %p97 = por %p95, %p96
      %p98 = scmp.ne.s32.totalorder %s90, %s92
      %p99 = scmp.eq.s32.totalorder %s26, 3
      %p100 = por %p98, %p99
      %p101 = scmp.ne.s32.totalorder %s92, %s93
      %p102 = scmp.eq.s32.totalorder %s26, 0
      %p103 = por %p101, %p102
      %p104 = scmp.ne.s32.totalorder %s92, %s93
      %p105 = scmp.eq.s32.totalorder %s27, 3
      %p106 = por %p104, %p105
      %p108 = scmp.ne.s32.totalorder %s93, %s107
      %p109 = scmp.eq.s32.totalorder %s27, 0
      %p110 = por %p108, %p109
      %s112 = sadd.s32 %s111, 1
      %p115 = scmp.eq.s32.totalorder %s21, 3
      %p116 = scmp.ne.s32.totalorder %s111, %s113
      %p117 = scmp.eq.s32.totalorder %s21, 0
      %p118 = por %p116, %p117
      %p119 = scmp.ne.s32.totalorder %s111, %s113
      %p120 = scmp.eq.s32.totalorder %s26, 3
      %p121 = por %p119, %p120
      %p122 = scmp.ne.s32.totalorder %s113, %s114
      %p123 = scmp.eq.s32.totalorder %s26, 0
      %p124 = por %p122, %p123
      %p125 = scmp.ne.s32.totalorder %s113, %s114
      %p126 = scmp.eq.s32.totalorder %s27, 3
      %p127 = por %p125, %p126
      %p129 = scmp.ne.s32.totalorder %s114, %s128
      %p130 = scmp.eq.s32.totalorder %s27, 0
      %p131 = por %p129, %p130
      %s133 = sadd.s32 %s132, 1
      %p136 = scmp.eq.s32.totalorder %s21, 3
      %p137 = scmp.ne.s32.totalorder %s132, %s134
      %p138 = scmp.eq.s32.totalorder %s21, 0
      %p139 = por %p137, %p138
      %p140 = scmp.ne.s32.totalorder %s132, %s134
      %p141 = scmp.eq.s32.totalorder %s26, 3
      %p142 = por %p140, %p141
      %p143 = scmp.ne.s32.totalorder %s134, %s135
      %p144 = scmp.eq.s32.totalorder %s26, 0
      %p145 = por %p143, %p144
      %p146 = scmp.ne.s32.totalorder %s134, %s135
      %p147 = scmp.eq.s32.totalorder %s27, 3
      %p148 = por %p146, %p147
      %p150 = scmp.ne.s32.totalorder %s135, %s149
      %p151 = scmp.eq.s32.totalorder %s27, 0
      %p152 = por %p150, %p151
      %s154 = sadd.s32 %s153, 1
      %p157 = scmp.eq.s32.totalorder %s21, 3
      %p158 = scmp.ne.s32.totalorder %s153, %s155
      %p159 = scmp.eq.s32.totalorder %s21, 0
      %p160 = por %p158, %p159
      %p161 = scmp.ne.s32.totalorder %s153, %s155
      %p162 = scmp.eq.s32.totalorder %s26, 3
      %p163 = por %p161, %p162
      %p164 = scmp.ne.s32.totalorder %s155, %s156
      %p165 = scmp.eq.s32.totalorder %s26, 0
      %p166 = por %p164, %p165
      %p167 = scmp.ne.s32.totalorder %s155, %s156
      %p168 = scmp.eq.s32.totalorder %s27, 3
      %p169 = por %p167, %p168
      %p171 = scmp.ne.s32.totalorder %s156, %s170
      %p172 = scmp.eq.s32.totalorder %s27, 0
      %p173 = por %p171, %p172
      %s175 = sadd.s32 %s174, 1
      %p178 = scmp.eq.s32.totalorder %s21, 3
      %p179 = scmp.ne.s32.totalorder %s174, %s176
      %p180 = scmp.eq.s32.totalorder %s21, 0
      %p181 = por %p179, %p180
      %p182 = scmp.ne.s32.totalorder %s174, %s176
      %p183 = scmp.eq.s32.totalorder %s26, 3
      %p184 = por %p182, %p183
      %p185 = scmp.ne.s32.totalorder %s176, %s177
      %p186 = scmp.eq.s32.totalorder %s26, 0
      %p187 = por %p185, %p186
      %p188 = scmp.ne.s32.totalorder %s176, %s177
      %p189 = scmp.eq.s32.totalorder %s27, 3
      %p190 = por %p188, %p189
      %p192 = scmp.ne.s32.totalorder %s177, %s191
      %p193 = scmp.eq.s32.totalorder %s27, 0
      %p194 = por %p192, %p193
      %s196 = sadd.s32 %s195, 1
      %p199 = scmp.eq.s32.totalorder %s21, 3
      %p200 = scmp.ne.s32.totalorder %s195, %s197
      %p201 = scmp.eq.s32.totalorder %s21, 0
      %p202 = por %p200, %p201
      %p203 = scmp.ne.s32.totalorder %s195, %s197
      %p204 = scmp.eq.s32.totalorder %s26, 3
      %p205 = por %p203, %p204
      %p206 = scmp.ne.s32.totalorder %s197, %s198
      %p207 = scmp.eq.s32.totalorder %s26, 0
      %p208 = por %p206, %p207
      %p209 = scmp.ne.s32.totalorder %s197, %s198
      %p210 = scmp.eq.s32.totalorder %s27, 3
      %p211 = por %p209, %p210
      %p213 = scmp.ne.s32.totalorder %s198, %s212
      %p214 = scmp.eq.s32.totalorder %s27, 0
      %p215 = por %p213, %p214
      %s217 = sadd.s32 %s216, 1
      %p220 = scmp.eq.s32.totalorder %s21, 3
      %p221 = scmp.ne.s32.totalorder %s216, %s218
      %p222 = scmp.eq.s32.totalorder %s21, 0
      %p223 = por %p221, %p222
      %p224 = scmp.ne.s32.totalorder %s216, %s218
      %p225 = scmp.eq.s32.totalorder %s26, 3
      %p226 = por %p224, %p225
      %p227 = scmp.ne.s32.totalorder %s218, %s219
      %p228 = scmp.eq.s32.totalorder %s26, 0
      %p229 = por %p227, %p228
      %p230 = scmp.ne.s32.totalorder %s218, %s219
      %p231 = scmp.eq.s32.totalorder %s27, 3
      %p232 = por %p230, %p231
      %p234 = scmp.ne.s32.totalorder %s219, %s233
      %p235 = scmp.eq.s32.totalorder %s27, 0
      %p236 = por %p234, %p235
      %s237 = ssub.s32 %s28, %s40
      %s238 = ssub.s32 %s29, %s36
      %s239 = sor.u32 %s237, %s238
      %p240 = scmp.eq.s32.totalorder %s239, 0
      %s242 = sadd.s32 %s241, 1
      %s243 = scalar_select %p240, %s241, %s242
      %p246 = pneg %p240
      %p247 = scmp.eq.s32.totalorder %s21, 3
      %p248 = por %p246, %p247
      %p249 = scmp.ne.s32.totalorder %s241, %s244
      %p250 = scmp.eq.s32.totalorder %s21, 0
      %p251 = por %p249, %p250
      %p252 = scmp.ne.s32.totalorder %s241, %s244
      %p253 = scmp.eq.s32.totalorder %s26, 3
      %p254 = por %p252, %p253
      %p255 = scmp.ne.s32.totalorder %s244, %s245
      %p256 = scmp.eq.s32.totalorder %s26, 0
      %p257 = por %p255, %p256
      %p258 = scmp.ne.s32.totalorder %s244, %s245
      %p259 = scmp.eq.s32.totalorder %s27, 3
      %p260 = por %p258, %p259
      %p262 = scmp.ne.s32.totalorder %s245, %s261
      %p263 = scmp.eq.s32.totalorder %s27, 0
      %p264 = por %p262, %p263
      %p265 = scmp.le.s32.totalorder 1, %s21
      %p266 = scmp.lt.s32.totalorder %s21, 5
      %p267 = pnand %p265, %p266
      %p268 = pneg %p267
      // Predicated region
      $region9: #{tpu_custom_call.1} parent=5 // pred_check
        _
      $region10: #{tpu_custom_call.1} parent=5 // pred_check_branch
        %270 = sbr.rel (%p267) target = $region12
      $region11: #{tpu_custom_call.1} parent=5 // pred_region
        %s271 = ssub.s32 %s21, 1
        // Predicated region
        $region13: #{tpu_custom_call.1} parent=11 // pred_check
          %p272 = pneg %p82
        $region14: #{tpu_custom_call.1} parent=11 // pred_check_branch
          %274 = sbr.rel (%p272) target = $region16
        $region15: #{tpu_custom_call.1} parent=11 // pred_region
          %276 = vsyncadd [#allocation4], 0
          %s277 = sshll.u32 %s1, 4
          %s278 = int_to_ptr.hbm [resolvable:$true] %s277
          %s279 = sshll.u32 [#allocation3], 4
          %s280 = int_to_ptr.vmem [resolvable:$true] %s279
          %285 = dma.hbm_to_vmem [thread:$0]  %s278, 256, %s280, [#allocation4], 64, 64, 4
        $region16: #{tpu_custom_call.1} parent=11 // pred_fallthru
          _
        // Predicated region
        $region17: #{tpu_custom_call.1} parent=11 // pred_check
          %p286 = pneg %p103
        $region18: #{tpu_custom_call.1} parent=11 // pred_check_branch
          %288 = sbr.rel (%p286) target = $region20
        $region19: #{tpu_custom_call.1} parent=11 // pred_region
          %290 = vsyncadd [#allocation7], 0
          %s292 = sshll.u32 %s2, 4
          %s293 = int_to_ptr.hbm [resolvable:$true] %s292
          %s294 = sshll.u32 [#allocation6], 4
          %s295 = int_to_ptr.vmem [resolvable:$true] %s294
          %297 = dma.hbm_to_vmem [thread:$0]  %s293, 16, %s295, [#allocation7]
        $region20: #{tpu_custom_call.1} parent=11 // pred_fallthru
          _
        // Predicated region
        $region21: #{tpu_custom_call.1} parent=11 // pred_check
          %p298 = pneg %p124
        $region22: #{tpu_custom_call.1} parent=11 // pred_check_branch
          %300 = sbr.rel (%p298) target = $region24
        $region23: #{tpu_custom_call.1} parent=11 // pred_region
          _
        $region24: #{tpu_custom_call.1} parent=11 // pred_fallthru
          _
        // Predicated region
        $region25: #{tpu_custom_call.1} parent=11 // pred_check
          %p301 = pneg %p145
        $region26: #{tpu_custom_call.1} parent=11 // pred_check_branch
          %303 = sbr.rel (%p301) target = $region28
        $region27: #{tpu_custom_call.1} parent=11 // pred_region
          %305 = vsyncadd [#allocation7], 0
          %s307 = sshll.u32 %s4, 4
          %s308 = int_to_ptr.hbm [resolvable:$true] %s307
          %s309 = sshll.u32 [#allocation8], 4
          %s310 = int_to_ptr.vmem [resolvable:$true] %s309
          %312 = dma.hbm_to_vmem [thread:$0]  %s308, 16, %s310, [#allocation7]
        $region28: #{tpu_custom_call.1} parent=11 // pred_fallthru
          _
        // Predicated region
        $region29: #{tpu_custom_call.1} parent=11 // pred_check
          %p313 = pneg %p166
        $region30: #{tpu_custom_call.1} parent=11 // pred_check_branch
          %315 = sbr.rel (%p313) target = $region32
        $region31: #{tpu_custom_call.1} parent=11 // pred_region
          _
        $region32: #{tpu_custom_call.1} parent=11 // pred_fallthru
          _
        // Predicated region
        $region33: #{tpu_custom_call.1} parent=11 // pred_check
          %p316 = pneg %p187
        $region34: #{tpu_custom_call.1} parent=11 // pred_check_branch
          %318 = sbr.rel (%p316) target = $region36
        $region35: #{tpu_custom_call.1} parent=11 // pred_region
          %320 = vsyncadd [#allocation10], 0
          %s322 = sshll.u32 %s6, 4
          %s323 = int_to_ptr.hbm [resolvable:$true] %s322
          %s324 = sshll.u32 [#allocation9], 4
          %s325 = int_to_ptr.vmem [resolvable:$true] %s324
          %327 = dma.hbm_to_vmem [thread:$0]  %s323, 64, %s325, [#allocation10]
        $region36: #{tpu_custom_call.1} parent=11 // pred_fallthru
          _
        // Predicated region
        $region37: #{tpu_custom_call.1} parent=11 // pred_check
          %p328 = pneg %p208
        $region38: #{tpu_custom_call.1} parent=11 // pred_check_branch
          %330 = sbr.rel (%p328) target = $region40
        $region39: #{tpu_custom_call.1} parent=11 // pred_region
          %332 = vsyncadd [#allocation10], 0
          %s333 = sshll.u32 %s7, 4
          %s334 = int_to_ptr.hbm [resolvable:$true] %s333
          %s335 = sshll.u32 [#allocation11], 4
          %s336 = int_to_ptr.vmem [resolvable:$true] %s335
          %341 = dma.hbm_to_vmem [thread:$0]  %s334, 256, %s336, [#allocation10], 64, 64, 4
        $region40: #{tpu_custom_call.1} parent=11 // pred_fallthru
          _
        // Predicated region
        $region41: #{tpu_custom_call.1} parent=11 // pred_check
          %p342 = pneg %p229
        $region42: #{tpu_custom_call.1} parent=11 // pred_check_branch
          %344 = sbr.rel (%p342) target = $region44
        $region43: #{tpu_custom_call.1} parent=11 // pred_region
          _
        $region44: #{tpu_custom_call.1} parent=11 // pred_fallthru
          _
      $region12: #{tpu_custom_call.1} parent=5 // pred_fallthru
        _
      %p345 = scmp.lt.s32.totalorder %s21, 4
      // Predicated region
      $region45: #{tpu_custom_call.1} parent=5 // pred_check
        %p346 = pneg %p345
      $region46: #{tpu_custom_call.1} parent=5 // pred_check_branch
        %348 = sbr.rel (%p346) target = $region48
      $region47: #{tpu_custom_call.1} parent=5 // pred_region
        // Predicated region
        $region49: #{tpu_custom_call.1} parent=47 // pred_check
          %p349 = pneg %p55
        $region50: #{tpu_custom_call.1} parent=47 // pred_check_branch
          %351 = sbr.rel (%p349) target = $region52
        $region51: #{tpu_custom_call.1} parent=47 // pred_region
          %p352 = scmp.lt.s32.totalorder %s28, 1
          %s353 = scalar_select %p352, %s28, 1
          %p354 = scmp.lt.s32.totalorder %s29, 1
          %s355 = scalar_select %p354, %s29, 1
          %s356 = smul.addr %s353, 2
          %s357 = sadd.s32 %s355, %s356
          %s358 = smul.addr %s357, 8
          %s359 = scalar_lea.vmem %s0, %s358
        $region52: #{tpu_custom_call.1} parent=47 // pred_fallthru
          _
      $region48: #{tpu_custom_call.1} parent=5 // pred_fallthru
        _
      %p360 = scmp.le.s32.totalorder 1, %s21
      %p361 = scmp.lt.s32.totalorder %s21, 5
      %p362 = pnand %p360, %p361
      %p363 = pneg %p362
      // Predicated region
      $region53: #{tpu_custom_call.1} parent=5 // pred_check
        _
      $region54: #{tpu_custom_call.1} parent=5 // pred_check_branch
        %365 = sbr.rel (%p362) target = $region56
      $region55: #{tpu_custom_call.1} parent=5 // pred_region
        %s366 = ssub.s32 %s21, 1
        // Predicated region
        $region57: #{tpu_custom_call.1} parent=55 // pred_check
          %p367 = pneg %p82
        $region58: #{tpu_custom_call.1} parent=55 // pred_check_branch
          %369 = sbr.rel (%p367) target = $region60
        $region59: #{tpu_custom_call.1} parent=55 // pred_region
          %371 = dma.done [#allocation4], 256
        $region60: #{tpu_custom_call.1} parent=55 // pred_fallthru
          _
        // Predicated region
        $region61: #{tpu_custom_call.1} parent=55 // pred_check
          %p372 = pneg %p103
        $region62: #{tpu_custom_call.1} parent=55 // pred_check_branch
          %374 = sbr.rel (%p372) target = $region64
        $region63: #{tpu_custom_call.1} parent=55 // pred_region
          %376 = dma.done [#allocation7], 16
        $region64: #{tpu_custom_call.1} parent=55 // pred_fallthru
          _
        // Predicated region
        $region65: #{tpu_custom_call.1} parent=55 // pred_check
          %p377 = pneg %p145
        $region66: #{tpu_custom_call.1} parent=55 // pred_check_branch
          %379 = sbr.rel (%p377) target = $region68
        $region67: #{tpu_custom_call.1} parent=55 // pred_region
          %381 = dma.done [#allocation7], 16
        $region68: #{tpu_custom_call.1} parent=55 // pred_fallthru
          _
        // Predicated region
        $region69: #{tpu_custom_call.1} parent=55 // pred_check
          %p382 = pneg %p187
        $region70: #{tpu_custom_call.1} parent=55 // pred_check_branch
          %384 = sbr.rel (%p382) target = $region72
        $region71: #{tpu_custom_call.1} parent=55 // pred_region
          %386 = dma.done [#allocation10], 64
        $region72: #{tpu_custom_call.1} parent=55 // pred_fallthru
          _
        // Predicated region
        $region73: #{tpu_custom_call.1} parent=55 // pred_check
          %p387 = pneg %p208
        $region74: #{tpu_custom_call.1} parent=55 // pred_check_branch
          %389 = sbr.rel (%p387) target = $region76
        $region75: #{tpu_custom_call.1} parent=55 // pred_region
          %391 = dma.done [#allocation10], 256
        $region76: #{tpu_custom_call.1} parent=55 // pred_fallthru
          _
        %p392 = scmp.lt.s32.totalorder %s30, 1
        %s393 = scalar_select %p392, %s30, 1
        %p394 = scmp.lt.s32.totalorder %s31, 1
        %s395 = scalar_select %p394, %s31, 1
        %s396 = smul.addr %s393, 2
        %s397 = sadd.s32 %s395, %s396
        %s398 = smul.addr %s397, 8
        %s399 = scalar_lea.vmem %s0, %s398
        %p400 = pneg %p61
        %p401 = pneg %p58
        %p402 = pneg %p82
        %p403 = pneg %p79
        %p404 = pneg %p103
        %p405 = pneg %p100
        %p406 = pneg %p124
        %p407 = pneg %p121
        %p408 = pneg %p145
        %p409 = pneg %p142
        %p410 = pneg %p166
        %p411 = pneg %p163
        %p412 = pneg %p187
        %p413 = pneg %p184
        %p414 = pneg %p208
        %p415 = pneg %p205
        %p416 = pneg %p229
        %p417 = pneg %p226
        %p418 = pneg %p257
        %p419 = pneg %p254
        %s420 = sand.u32 %s244, 1
        %s421 = scalar_lea.sflag [#allocation5], %s420
        %s422 = sand.u32 %s244, 1
        %s423 = smul.addr %s422, 8
        %s424 = scalar_lea.vmem [#allocation12], %s423
        %p425 = scmp.lt.s32.totalorder %s30, 1
        %s426 = scalar_select %p425, %s30, 1
        %p427 = scmp.lt.s32.totalorder %s31, 1
        %s428 = scalar_select %p427, %s31, 1
        %s429 = smul.addr %s426, 2
        %s430 = sadd.s32 %s428, %s429
        %s431 = smul.addr %s430, 8
        %s432 = scalar_lea.vmem %s0, %s431
        %p434 = scmp.eq.s32.totalorder %s31, 0
        // Predicated region
        $region77: #{tpu_custom_call.1} parent=55 // pred_check
          %p435 = pneg %p434
        $region78: #{tpu_custom_call.1} parent=55 // pred_check_branch
          %437 = sbr.rel (%p435) target = $region80
        $region79: #{tpu_custom_call.1} parent=55 // pred_region
          %v438 = vld [vmem:[%s8] sm:$0x1]
          %vm439 = vcmask 253952
          %440 = vst.msk [vmem:[#allocation2] sm:$0x1] %vm439, %v438
        $region80: #{tpu_custom_call.1} parent=55 // pred_fallthru
          _
        %v441 = vld [vmem:[%s432] sm:$0xff]
        %v442 = vlaneseq
        %v443 = vshrl.u32 %v442, 7
        %v444 = vlaneseq
        %v445 = vand.u32 %v444, 127
        %vm446 = vcmp.le.s32.totalorder %v445, %v443
        %v447 = vsel %vm446, 1, 0
        %v448 = vcvt.s32.f32 %v447
        %v449 = vld [vmem:[%s3] sm:$0xf]
        %v450 = vmul.f32 %v441, %v441
        %vm451 = vcmask 261120
        %v452 = vsel %vm451, %v450, 0.0
        %453 = vadd.xlane.f32.xlu0 %v452
        %v454 = vpop.xlane.xlu0 %453
        %v455 = vrcp.pop 32.0
        %v456 = vmul.f32 32.0, %v455
        %v457 = vsub.f32 1.0, %v456
        %v458 = vmul.f32 %v455, %v457
        %v459 = vadd.f32 %v455, %v458
        %vm460 = vweird.f32 %v455
        %v461 = vsel %vm460, %v455, %v459
        %v462 = vmul.f32 %v454, %v461
        %v463 = vadd.f32 %v462, 1e-06
        %v464 = vrsqrt.pop %v463
        %v465 = vmul.f32 %v464, %v463
        %v466 = vmul.f32 %v465, %v464
        %v467 = vmul.f32 0.5, %v466
        %v468 = vsub.f32 1.5, %v467
        %v469 = vmul.f32 %v464, %v468
        %vm470 = vweird.f32 %v463
        %vm471 = vweird.f32 %v464
        %vm472 = vmor %vm470, %vm471
        %v473 = vsel %vm472, %v464, %v469
        %v474 = vmul.f32 %v441, %v473
        %v475 = vperm.slane %v449, 0
        %v476 = vmul.f32 %v474, %v475
        %v477 = vpack.c.bf16 %v476, %v476
        %v478 = vld [vmem:[#allocation3] sm:$0xf]
        %v479 = vld [vmem:[#allocation3 + $0x4] sm:$0xf]
        %v480 = vld [vmem:[#allocation3 + $0x8] sm:$0xf]
        %v481 = vld [vmem:[#allocation3 + $0xc] sm:$0xf]
        %v482 = vld [vmem:[#allocation6] sm:$0x1]
        %v484 = vperm.slane %v482, 0
        %v490 = vunpack.c.l.b16 %v478
        %v491 = vunpack.c.l.b16 %v479
        %v492 = vunpack.c.l.b16 %v480
        %v493 = vunpack.c.l.b16 %v481
        %v494 = vpack.c.b16 %v491, %v490
        %v495 = vpack.c.b16 %v493, %v492
        %v499 = vsel %vm451, %v477, 0
        %501 = vmatpush.bf16.msra.mxu0 0
        %502 = vmatpush.bf16.msra.mxu0 0
        %503 = vmatpush.bf16.msra.mxu0 0
        %504 = vmatpush.bf16.msra.mxu0 0
        %505 = vmatpush.bf16.msra.mxu0 0
        %506 = vmatpush.bf16.msra.mxu0 0
        %507 = vmatpush.bf16.msra.mxu0 %v495
        %508 = vmatpush.bf16.msra.mxu0 %v494
        %509 = vmatmul.bf16.gmra.mxu0 %v499
        %v510 = vpop.f32.mrf.mxu0
        %v511 = vadd.f32 %v484, %v510
        %v512 = vpop.f32.mrf.mxu0
        %513 = vdwg.mxu0
        %v514 = vsub.f32 0.0, %v511
        %v515 = vmul.f32 %v514, 1.442695
        %v516 = vpow.pop %v515
        %v517 = vadd.f32 %v516, 1.0
        %v518 = vrcp.pop %v517
        %v519 = vmul.f32 %v511, %v518
        %521 = vrot.lane.b32.xlu0 %v519, 96
        %v522 = vpop.permute.xlu0 %521
        %v524 = vmul.f32 %v511, %v522
        %v525 = vld [vmem:[#allocation8] sm:$0x1]
        %v526 = vmul.f32 %v525, 1.442695
        %v527 = vpow.pop %v526
        %v528 = vsub.f32 0.0, %v527
        %v529 = vmax.f32 %v511, 0.0
        %v530 = vand.u32 2147483647, %v511
        %v531 = vsub.f32 0.0, %v530
        %v532 = vmul.f32 %v531, 1.442695
        %v533 = vpow.pop %v532
        %v534 = vadd.f32 %v533, 1.0
        %v535 = vlog2.pop %v534
        %v536 = vmul.f32 %v535, 0.6931472
        %v537 = vmul.f32 -0.5, %v533
        %v538 = vadd.f32 %v537, 1.0
        %v539 = vmul.f32 %v538, %v533
        %v540 = vand.u32 2147483647, %v533
        %vm541 = vcmp.lt.f32.partialorder %v540, 0.0004427343
        %v542 = vsel %vm541, %v539, %v536
        %v543 = vadd.f32 %v529, %v542
        %v545 = vperm.slane %v528, 0
        %548 = vrot.lane.b32.xlu0 %v543, 32
        %v549 = vpop.permute.xlu0 %548
        %v551 = vmul.f32 %v545, %v549
        %vm552 = vcmask 64512
        %v554 = vsel %vm552, %v448, 0
        %556 = vmatpush.msra.mxu0 0.0
        %557 = vmatpush.msra.mxu0 0.0
        %558 = vmatpush.msra.mxu0 0.0
        %559 = vmatpush.msra.mxu0 0.0
        %560 = vmatpush.msra.mxu0 0.0
        %561 = vmatpush.msra.mxu0 0.0
        %562 = vmatpush.msra.mxu0 0.0
        %563 = vmatpush.msra.mxu0 0.0
        %564 = vmatpush.msra.mxu0 0.0
        %565 = vmatpush.msra.mxu0 0.0
        %566 = vmatpush.msra.mxu0 0.0
        %567 = vmatpush.msra.mxu0 0.0
        %568 = vmatpush.msra.mxu0 0.0
        %569 = vmatpush.msra.mxu0 0.0
        %570 = vmatpush.msra.mxu0 0.0
        %571 = vmatpush.msra.mxu0 %v551
        %572 = vmatmul.f32.gmra.mxu0 %v554
        %v573 = vpop.f32.mrf.mxu0
        %v574 = vadd.f32 0.0, %v573
        %575 = vdwg.mxu0
        %v576 = vld [vmem:[#allocation9] sm:$0xf]
        %v578 = vrot.slane %v574, 7
        %v580 = vadd.f32 %v574, %v578
        %v581 = vmul.f32 %v580, 0.5
        %v582 = vperm.slane %v581, 0
        %v583 = vsub.f32 %v574, %v582
        %v584 = vmul.f32 %v583, 1.442695
        %v585 = vpow.pop %v584
        %vm586 = vcmask 31744
        %v588 = vsel %vm586, %v585, 0
        %vm590 = vcmask 1043456
        %v592 = vsel %vm590, %v576, 0
        %594 = vmatpush.msra.mxu0 0.0
        %595 = vmatpush.msra.mxu0 0.0
        %596 = vmatpush.msra.mxu0 0.0
        %597 = vmatpush.msra.mxu0 0.0
        %598 = vmatpush.msra.mxu0 0.0
        %599 = vmatpush.msra.mxu0 0.0
        %600 = vmatpush.msra.mxu0 0.0
        %601 = vmatpush.msra.mxu0 0.0
        %602 = vmatpush.msra.mxu0 0.0
        %603 = vmatpush.msra.mxu0 0.0
        %604 = vmatpush.msra.mxu0 0.0
        %605 = vmatpush.msra.mxu0 0.0
        %606 = vmatpush.msra.mxu0 0.0
        %607 = vmatpush.msra.mxu0 0.0
        %608 = vmatpush.msra.mxu0 0.0
        %609 = vmatpush.msra.mxu0 %v592
        %610 = vmatmul.f32.gmra.mxu0 %v588
        %v611 = vpop.f32.mrf.mxu0
        %v612 = vadd.f32 0.0, %v611
        %613 = vdwg.mxu0
        %v614 = vsub.f32 %v582, %v574
        %v615 = vmul.f32 %v614, 1.442695
        %v616 = vpow.pop %v615
        %v618 = vsel %vm586, %v616, 0
        %620 = vmatpush.msra.mxu0 0.0
        %621 = vmatpush.msra.mxu0 0.0
        %622 = vmatpush.msra.mxu0 0.0
        %623 = vmatpush.msra.mxu0 0.0
        %624 = vmatpush.msra.mxu0 0.0
        %625 = vmatpush.msra.mxu0 0.0
        %626 = vmatpush.msra.mxu0 0.0
        %627 = vmatpush.msra.mxu0 0.0
        %628 = vmatpush.msra.mxu0 0.0
        %629 = vmatpush.msra.mxu0 0.0
        %630 = vmatpush.msra.mxu0 0.0
        %631 = vmatpush.msra.mxu0 0.0
        %632 = vmatpush.msra.mxu0 0.0
        %633 = vmatpush.msra.mxu0 0.0
        %634 = vmatpush.msra.mxu0 0.0
        %635 = vmatpush.msra.mxu0 %v592
        %636 = vmatmul.f32.gmra.mxu0 %v618
        %v637 = vpop.f32.mrf.mxu0
        %v638 = vadd.f32 0.0, %v637
        %639 = vdwg.mxu0
        %v640 = vpack.c.bf16 %v448, %v448
        %v641 = vmul.f32 %v638, %v524
        %v642 = vpack.c.bf16 %v641, %v641
        %v644 = vsel %vm552, %v640, 0
        %v647 = vsel %vm590, %v642, 0
        %649 = vmatpush.bf16.msra.mxu0 0
        %650 = vmatpush.bf16.msra.mxu0 0
        %651 = vmatpush.bf16.msra.mxu0 0
        %652 = vmatpush.bf16.msra.mxu0 0
        %653 = vmatpush.bf16.msra.mxu0 0
        %654 = vmatpush.bf16.msra.mxu0 0
        %655 = vmatpush.bf16.msra.mxu0 0
        %656 = vmatpush.bf16.msra.mxu0 %v647
        %657 = vmatmul.bf16.gmra.mxu0 %v644
        %v658 = vpop.f32.mrf.mxu0
        %v659 = vadd.f32 0.0, %v658
        %v660 = vpop.f32.mrf.mxu0
        %661 = vdwg.mxu0
        %v662 = vmul.f32 %v612, %v659
        %v663 = vmul.f32 %v574, 1.442695
        %v664 = vpow.pop %v663
        %v666 = vsel %vm586, %v664, 0
        %668 = vmatpush.msra.mxu0 0.0
        %669 = vmatpush.msra.mxu0 0.0
        %670 = vmatpush.msra.mxu0 0.0
        %671 = vmatpush.msra.mxu0 0.0
        %672 = vmatpush.msra.mxu0 0.0
        %673 = vmatpush.msra.mxu0 0.0
        %674 = vmatpush.msra.mxu0 0.0
        %675 = vmatpush.msra.mxu0 0.0
        %676 = vmatpush.msra.mxu0 0.0
        %677 = vmatpush.msra.mxu0 0.0
        %678 = vmatpush.msra.mxu0 0.0
        %679 = vmatpush.msra.mxu0 0.0
        %680 = vmatpush.msra.mxu0 0.0
        %681 = vmatpush.msra.mxu0 0.0
        %682 = vmatpush.msra.mxu0 0.0
        %683 = vmatpush.msra.mxu0 %v592
        %684 = vmatmul.f32.gmra.mxu0 %v666
        %v685 = vpop.f32.mrf.mxu0
        %v686 = vadd.f32 0.0, %v685
        %687 = vdwg.mxu0
        %v688 = vld [vmem:[#allocation2] sm:$0x1]
        %v690 = vperm.slane %v688, 0
        %v692 = vmul.f32 %v686, %v690
        %v693 = vadd.f32 %v662, %v692
        %vm694 = vcmask 261127
        %695 = vst.msk [vmem:[#allocation2 - $0x7] sm:$0x80] %vm694, %v693
        %v696 = vld [vmem:[%s5] sm:$0xff]
        %v697 = vld [vmem:[%s5 + $0x8] sm:$0xff]
        %v698 = vld [vmem:[%s5 + $0x10] sm:$0xff]
        %v699 = vld [vmem:[%s5 + $0x18] sm:$0xff]
        %v701 = vsel %vm451, %v693, 0
        %703 = vmatpush.msra.mxu0 0.0
        %704 = vmatpush.msra.mxu0 0.0
        %705 = vmatpush.msra.mxu0 0.0
        %706 = vmatpush.msra.mxu0 0.0
        %707 = vmatpush.msra.mxu0 0.0
        %708 = vmatpush.msra.mxu0 0.0
        %709 = vmatpush.msra.mxu0 0.0
        %710 = vmatpush.msra.mxu0 0.0
        %711 = vmatpush.msra.mxu0 0.0
        %712 = vmatpush.msra.mxu0 0.0
        %713 = vmatpush.msra.mxu0 0.0
        %714 = vmatpush.msra.mxu0 0.0
        %715 = vmatpush.msra.mxu0 %v699
        %716 = vmatpush.msra.mxu0 %v698
        %717 = vmatpush.msra.mxu0 %v697
        %718 = vmatpush.msra.mxu0 %v696
        %719 = vmatmul.f32.gmra.mxu0 %v701
        %v720 = vpop.f32.mrf.mxu0
        %v721 = vadd.f32 0.0, %v720
        %722 = vdwg.mxu0
        %v723 = vmul.f32 %v721, 0.125
        %v725 = vsel %vm586, %v723, 0
        %727 = vmatpush.msra.mxu0 0.0
        %728 = vmatpush.msra.mxu0 0.0
        %729 = vmatpush.msra.mxu0 0.0
        %730 = vmatpush.msra.mxu0 0.0
        %731 = vmatpush.msra.mxu0 0.0
        %732 = vmatpush.msra.mxu0 0.0
        %733 = vmatpush.msra.mxu0 0.0
        %734 = vmatpush.msra.mxu0 0.0
        %735 = vmatpush.msra.mxu0 0.0
        %736 = vmatpush.msra.mxu0 0.0
        %737 = vmatpush.msra.mxu0 0.0
        %738 = vmatpush.msra.mxu0 0.0
        %739 = vmatpush.msra.mxu0 0.0
        %740 = vmatpush.msra.mxu0 0.0
        %741 = vmatpush.msra.mxu0 0.0
        %742 = vmatpush.msra.mxu0 %v592
        %743 = vmatmul.f32.gmra.mxu0 %v725
        %v744 = vpop.f32.mrf.mxu0
        %v745 = vadd.f32 0.0, %v744
        %746 = vdwg.mxu0
        %v747 = vsub.f32 %v693, %v745
        %v748 = vmul.f32 %v747, %v747
        %v750 = vsel %vm451, %v748, 0
        %752 = vmatpush.msra.mxu0 0.0
        %753 = vmatpush.msra.mxu0 0.0
        %754 = vmatpush.msra.mxu0 0.0
        %755 = vmatpush.msra.mxu0 0.0
        %756 = vmatpush.msra.mxu0 0.0
        %757 = vmatpush.msra.mxu0 0.0
        %758 = vmatpush.msra.mxu0 0.0
        %759 = vmatpush.msra.mxu0 0.0
        %760 = vmatpush.msra.mxu0 0.0
        %761 = vmatpush.msra.mxu0 0.0
        %762 = vmatpush.msra.mxu0 0.0
        %763 = vmatpush.msra.mxu0 0.0
        %764 = vmatpush.msra.mxu0 %v699
        %765 = vmatpush.msra.mxu0 %v698
        %766 = vmatpush.msra.mxu0 %v697
        %767 = vmatpush.msra.mxu0 %v696
        %768 = vmatmul.f32.gmra.mxu0 %v750
        %v769 = vpop.f32.mrf.mxu0
        %v770 = vadd.f32 0.0, %v769
        %771 = vdwg.mxu0
        %v772 = vmul.f32 %v770, 0.125
        %v774 = vsel %vm586, %v772, 0
        %776 = vmatpush.msra.mxu0 0.0
        %777 = vmatpush.msra.mxu0 0.0
        %778 = vmatpush.msra.mxu0 0.0
        %779 = vmatpush.msra.mxu0 0.0
        %780 = vmatpush.msra.mxu0 0.0
        %781 = vmatpush.msra.mxu0 0.0
        %782 = vmatpush.msra.mxu0 0.0
        %783 = vmatpush.msra.mxu0 0.0
        %784 = vmatpush.msra.mxu0 0.0
        %785 = vmatpush.msra.mxu0 0.0
        %786 = vmatpush.msra.mxu0 0.0
        %787 = vmatpush.msra.mxu0 0.0
        %788 = vmatpush.msra.mxu0 0.0
        %789 = vmatpush.msra.mxu0 0.0
        %790 = vmatpush.msra.mxu0 0.0
        %791 = vmatpush.msra.mxu0 %v592
        %792 = vmatmul.f32.gmra.mxu0 %v774
        %v793 = vpop.f32.mrf.mxu0
        %v794 = vadd.f32 1e-05, %v793
        %795 = vdwg.mxu0
        %v796 = vrsqrt.pop %v794
        %v797 = vmul.f32 %v796, %v794
        %v798 = vmul.f32 %v797, %v796
        %v799 = vmul.f32 0.5, %v798
        %v800 = vsub.f32 1.5, %v799
        %v801 = vmul.f32 %v796, %v800
        %vm802 = vweird.f32 %v794
        %vm803 = vweird.f32 %v796
        %vm804 = vmor %vm802, %vm803
        %v805 = vsel %vm804, %v796, %v801
        %v806 = vmul.f32 %v747, %v805
        %v807 = vperm.slane %v449, 1
        %v808 = vmul.f32 %v806, %v807
        %v809 = vperm.slane %v449, 2
        %v810 = vadd.f32 %v808, %v809
        %v811 = vpack.c.bf16 %v810, %v810
        %v812 = vld [vmem:[#allocation11] sm:$0xf]
        %v813 = vld [vmem:[#allocation11 + $0x4] sm:$0xf]
        %v814 = vld [vmem:[#allocation11 + $0x8] sm:$0xf]
        %v815 = vld [vmem:[#allocation11 + $0xc] sm:$0xf]
        %v816 = vperm.slane %v449, 3
        %v821 = vunpack.c.l.b16 %v812
        %v822 = vunpack.c.l.b16 %v813
        %v823 = vunpack.c.l.b16 %v814
        %v824 = vunpack.c.l.b16 %v815
        %v825 = vpack.c.b16 %v822, %v821
        %v826 = vpack.c.b16 %v824, %v823
        %v830 = vsel %vm451, %v811, 0
        %832 = vmatpush.bf16.msra.mxu0 0
        %833 = vmatpush.bf16.msra.mxu0 0
        %834 = vmatpush.bf16.msra.mxu0 0
        %835 = vmatpush.bf16.msra.mxu0 0
        %836 = vmatpush.bf16.msra.mxu0 0
        %837 = vmatpush.bf16.msra.mxu0 0
        %838 = vmatpush.bf16.msra.mxu0 %v826
        %839 = vmatpush.bf16.msra.mxu0 %v825
        %840 = vmatmul.bf16.gmra.mxu0 %v830
        %v841 = vpop.f32.mrf.mxu0
        %v842 = vadd.f32 %v816, %v841
        %v843 = vpop.f32.mrf.mxu0
        %844 = vdwg.mxu0
        %845 = vrot.lane.b32.xlu0 %v519, 64
        %v846 = vpop.permute.xlu0 %845
        %v848 = vmul.f32 %v842, %v846
        %v849 = vadd.f32 %v848, %v441
        %850 = vst.msk [vmem:[%s424] sm:$0xff] %vm451, %v849
        %s851 = sand.u32 %s244, 1
        %s852 = scalar_lea.sflag [#allocation5], %s851
        %s853 = sand.u32 %s244, 1
        %s854 = smul.addr %s853, 8
        %s855 = scalar_lea.vmem [#allocation12], %s854
        // Predicated region
        $region81: #{tpu_custom_call.1} parent=55 // pred_check
          %p856 = pneg %p254
        $region82: #{tpu_custom_call.1} parent=55 // pred_check_branch
          %858 = sbr.rel (%p856) target = $region84
        $region83: #{tpu_custom_call.1} parent=55 // pred_region
          %860 = vsyncadd %s852, 0
          %s861 = smul.addr %s30, 2
          %s862 = sadd.s32 %s31, %s861
          %s863 = smul.addr %s862, 8
          %s864 = scalar_lea.hbm %s9, %s863
          %s866 = sshll.u32 %s855, 4
          %s867 = int_to_ptr.vmem [resolvable:$true] %s866
          %s868 = sshll.u32 %s864, 4
          %s869 = int_to_ptr.hbm [resolvable:$true] %s868
          %871 = dma.vmem_to_hbm [thread:$0]  %s867, 128, %s869, %s852
        $region84: #{tpu_custom_call.1} parent=55 // pred_fallthru
          _
      $region56: #{tpu_custom_call.1} parent=5 // pred_fallthru
        _
      %p872 = scmp.le.s32.totalorder 2, %s21
      // Predicated region
      $region85: #{tpu_custom_call.1} parent=5 // pred_check
        %p873 = pneg %p872
      $region86: #{tpu_custom_call.1} parent=5 // pred_check_branch
        %875 = sbr.rel (%p873) target = $region88
      $region87: #{tpu_custom_call.1} parent=5 // pred_region
        %s876 = ssub.s32 %s21, 2
        // Predicated region
        $region89: #{tpu_custom_call.1} parent=87 // pred_check
          %p877 = pneg %p260
        $region90: #{tpu_custom_call.1} parent=87 // pred_check_branch
          %879 = sbr.rel (%p877) target = $region92
        $region91: #{tpu_custom_call.1} parent=87 // pred_region
          %s880 = sand.u32 %s245, 1
          %s881 = scalar_lea.sflag [#allocation5], %s880
          %s882 = sand.u32 %s245, 1
          %s883 = smul.addr %s882, 8
          %s884 = scalar_lea.vmem [#allocation12], %s883
          %886 = dma.done %s881, 128
        $region92: #{tpu_custom_call.1} parent=87 // pred_fallthru
          _
      $region88: #{tpu_custom_call.1} parent=5 // pred_fallthru
        _
    $region6: #{tpu_custom_call.1} parent=1 // loop_footer
      %s25 = sadd.s32 1, %s21
    $region7: #{tpu_custom_call.1} parent=1 // loop_footer_branch
      %20 = sbr.rel target = $region3
    $region8: #{tpu_custom_call.1} parent=1 // loop_exit
      _
    %887 = vsyncpa [#allocation4], 1
    %s888 = scalar_lea.sflag [#allocation4], 1
    %889 = vsyncpa %s888, 1
    %890 = vsyncpa [#allocation7], 1
    %891 = vsyncpa [#allocation10], 1
    %892 = vsyncpa [#allocation5], 1
    %s893 = scalar_lea.sflag [#allocation5], 1
    %894 = vsyncpa %s893, 1

// kernel: tpu_custom_call.1
$region0: #{tpu_custom_call.1}
  #allocation0 [shape = 'u32[]', space=smem, size = 0x4, offset = 0x4, fixed_abs, tag = 'smem constant byte address 0x4 - core index']
  #allocation1 [shape = 'u32[72,128]{1,0:T(1,128)}', space=vmem, size = 0x9000, scoped, tag = 'internal scratch']
  #allocation2 [shape = 'f32[1,32]{1,0:T(1,128)}', space=vmem, size = 0x200, scoped, tag = 'scratch operand']
  %s0 = inlined_call_operand.vmem [shape: f32[2,16,32], index: 0, kind: input, shape index: {}]
  %s1 = inlined_call_operand.hbm [shape: bf16[32,100], index: 1, kind: input, shape index: {}]
  %s2 = inlined_call_operand.hbm [shape: f32[1,100], index: 2, kind: input, shape index: {}]
  %s3 = inlined_call_operand.vmem [shape: f32[4,32], index: 3, kind: input, shape index: {}]
  %s4 = inlined_call_operand.hbm [shape: f32[1,4], index: 4, kind: input, shape index: {}]
  %s5 = inlined_call_operand.vmem [shape: f32[32,4], index: 5, kind: input, shape index: {}]
  %s6 = inlined_call_operand.hbm [shape: f32[4,32], index: 6, kind: input, shape index: {}]
  %s7 = inlined_call_operand.hbm [shape: bf16[32,32], index: 7, kind: input, shape index: {}]
  %s8 = inlined_call_operand.vmem [shape: f32[1,32], index: 8, kind: input, shape index: {}]
  %s9 = inlined_call_operand.hbm [shape: f32[2,16,32], index: 9, kind: output, shape index: {}]
  %s10 = sld [smem:[#allocation0]]
  $region93: #{tpu_custom_call.1} parent=0
    _
  %s12 = ssub.s32 1, %s10
  %s13 = scalar_select 0, %s12, %s10
  $region1: #{tpu_custom_call.1} parent=0
    #allocation3 [shape = 'u8[8192]{0}', space=vmem, size = 0x2000, scoped, tag = 'input window, operand 1, single buffered']
    #allocation4 [shape = 's32[2]{0}', space=sflag, size = 0x8, scoped, tag = 'scoped memory for tpu_custom_call.1']
    #allocation5 [shape = 's32[2]{0}', space=sflag, size = 0x8, scoped, tag = 'scoped memory for tpu_custom_call.1']
    #allocation6 [shape = 'u8[512]{0}', space=vmem, size = 0x400, scoped, tag = 'input window, operand 2, single buffered']
    #allocation7 [shape = 's32[1]{0}', space=sflag, size = 0x4, scoped, tag = 'scoped memory for tpu_custom_call.1']
    #allocation8 [shape = 'u8[512]{0}', space=vmem, size = 0x400, scoped, tag = 'input window, operand 4, single buffered']
    #allocation9 [shape = 'u8[2048]{0}', space=vmem, size = 0x800, scoped, tag = 'input window, operand 6, single buffered']
    #allocation10 [shape = 's32[1]{0}', space=sflag, size = 0x4, scoped, tag = 'scoped memory for tpu_custom_call.1']
    #allocation11 [shape = 'u8[8192]{0}', space=vmem, size = 0x2000, scoped, tag = 'input window, operand 7, single buffered']
    #allocation12 [shape = 'u8[8192]{0}', space=vmem, size = 0x2000, scoped, tag = 'output window, operand 0']
    %14 = vsyncpa [#allocation4], 0
    %15 = vsyncpa [#allocation7], 0
    %16 = vsyncpa [#allocation10], 0
    %17 = vsyncpa [#allocation5], 0
    %s18 = scalar_lea.sflag [#allocation5], 1
    %19 = vsyncpa %s18, 0
    loop: start=0, step=1, limit=6
    $region2: #{tpu_custom_call.1} parent=1 // loop_pre_header
      _
    $region3: #{tpu_custom_call.1} parent=1 // loop_header
      %s21 = sphi 0, %s25
      %p22 = scmp.ge.s32.totalorder %s21, 6
      %s28 = sphi 0, %s40
      %s29 = sphi 0, %s36
      %s30 = sphi 0, %s28
      %s31 = sphi 0, %s29
      %s32 = sphi 0, %s30
      %s33 = sphi 0, %s31
      %s45 = sphi 0, %s47
      %s48 = sphi 0, %s45
      %s49 = sphi 0, %s48
      %s65 = sphi 0, %s49
      %s69 = sphi 0, %s69
      %s71 = sphi 0, %s69
      %s72 = sphi 0, %s71
      %s86 = sphi 0, %s72
      %s90 = sphi 0, %s90
      %s92 = sphi 0, %s90
      %s93 = sphi 0, %s92
      %s107 = sphi 0, %s93
      %s111 = sphi 0, %s111
      %s113 = sphi 0, %s111
      %s114 = sphi 0, %s113
      %s128 = sphi 0, %s114
      %s132 = sphi 0, %s132
      %s134 = sphi 0, %s132
      %s135 = sphi 0, %s134
      %s149 = sphi 0, %s135
      %s153 = sphi 0, %s153
      %s155 = sphi 0, %s153
      %s156 = sphi 0, %s155
      %s170 = sphi 0, %s156
      %s174 = sphi 0, %s174
      %s176 = sphi 0, %s174
      %s177 = sphi 0, %s176
      %s191 = sphi 0, %s177
      %s195 = sphi 0, %s195
      %s197 = sphi 0, %s195
      %s198 = sphi 0, %s197
      %s212 = sphi 0, %s198
      %s216 = sphi 0, %s216
      %s218 = sphi 0, %s216
      %s219 = sphi 0, %s218
      %s233 = sphi 0, %s219
      %s241 = sphi 0, %s243
      %s244 = sphi 0, %s241
      %s245 = sphi 0, %s244
      %s261 = sphi 0, %s245
    $region4: #{tpu_custom_call.1} parent=1 // loop_header_branch
      %24 = sbr.rel (%p22) target = $region8
    $region5: #{tpu_custom_call.1} parent=1 // loop_body
      %s26 = ssub.s32 %s21, 1
      %s27 = ssub.s32 %s21, 2
      %s34 = sadd.s32 1, %s29
      %p35 = scmp.ge.s32.totalorder %s34, 2
      %s36 = scalar_select %p35, 0, %s34
      %s37 = sadd.s32 1, %s28
      %s38 = scalar_select %p35, %s37, %s28
      %p39 = scmp.ge.s32.totalorder %s38, 2
      %s40 = scalar_select %p39, 0, %s38
      %s41 = ssub.s32 %s28, %s40
      %s42 = ssub.s32 %s29, %s36
      %s43 = sor.u32 %s41, %s42
      %p44 = scmp.eq.s32.totalorder %s43, 0
      %s46 = sadd.s32 %s45, 1
      %s47 = scalar_select %p44, %s45, %s46
      %p50 = pneg %p44
      %p51 = scmp.eq.s32.totalorder %s21, 3
      %p52 = por %p50, %p51
      %p53 = scmp.ne.s32.totalorder %s45, %s48
      %p54 = scmp.eq.s32.totalorder %s21, 0
      %p55 = por %p53, %p54
      %p56 = scmp.ne.s32.totalorder %s45, %s48
      %p57 = scmp.eq.s32.totalorder %s26, 3
      %p58 = por %p56, %p57
      %p59 = scmp.ne.s32.totalorder %s48, %s49
      %p60 = scmp.eq.s32.totalorder %s26, 0
      %p61 = por %p59, %p60
      %p62 = scmp.ne.s32.totalorder %s48, %s49
      %p63 = scmp.eq.s32.totalorder %s27, 3
      %p64 = por %p62, %p63
      %p66 = scmp.ne.s32.totalorder %s49, %s65
      %p67 = scmp.eq.s32.totalorder %s27, 0
      %p68 = por %p66, %p67
      %s70 = sadd.s32 %s69, 1
      %p73 = scmp.eq.s32.totalorder %s21, 3
      %p74 = scmp.ne.s32.totalorder %s69, %s71
      %p75 = scmp.eq.s32.totalorder %s21, 0
      %p76 = por %p74, %p75
      %p77 = scmp.ne.s32.totalorder %s69, %s71
      %p78 = scmp.eq.s32.totalorder %s26, 3
      %p79 = por %p77, %p78
      %p80 = scmp.ne.s32.totalorder %s71, %s72
      %p81 = scmp.eq.s32.totalorder %s26, 0
      %p82 = por %p80, %p81
      %p83 = scmp.ne.s32.totalorder %s71, %s72
      %p84 = scmp.eq.s32.totalorder %s27, 3
      %p85 = por %p83, %p84
      %p87 = scmp.ne.s32.totalorder %s72, %s86
      %p88 = scmp.eq.s32.totalorder %s27, 0
      %p89 = por %p87, %p88
      %s91 = sadd.s32 %s90, 1
      %p94 = scmp.eq.s32.totalorder %s21, 3
      %p95 = scmp.ne.s32.totalorder %s90, %s92
      %p96 = scmp.eq.s32.totalorder %s21, 0
      %p97 = por %p95, %p96
      %p98 = scmp.ne.s32.totalorder %s90, %s92
      %p99 = scmp.eq.s32.totalorder %s26, 3
      %p100 = por %p98, %p99
      %p101 = scmp.ne.s32.totalorder %s92, %s93
      %p102 = scmp.eq.s32.totalorder %s26, 0
      %p103 = por %p101, %p102
      %p104 = scmp.ne.s32.totalorder %s92, %s93
      %p105 = scmp.eq.s32.totalorder %s27, 3
      %p106 = por %p104, %p105
      %p108 = scmp.ne.s32.totalorder %s93, %s107
      %p109 = scmp.eq.s32.totalorder %s27, 0
      %p110 = por %p108, %p109
      %s112 = sadd.s32 %s111, 1
      %p115 = scmp.eq.s32.totalorder %s21, 3
      %p116 = scmp.ne.s32.totalorder %s111, %s113
      %p117 = scmp.eq.s32.totalorder %s21, 0
      %p118 = por %p116, %p117
      %p119 = scmp.ne.s32.totalorder %s111, %s113
      %p120 = scmp.eq.s32.totalorder %s26, 3
      %p121 = por %p119, %p120
      %p122 = scmp.ne.s32.totalorder %s113, %s114
      %p123 = scmp.eq.s32.totalorder %s26, 0
      %p124 = por %p122, %p123
      %p125 = scmp.ne.s32.totalorder %s113, %s114
      %p126 = scmp.eq.s32.totalorder %s27, 3
      %p127 = por %p125, %p126
      %p129 = scmp.ne.s32.totalorder %s114, %s128
      %p130 = scmp.eq.s32.totalorder %s27, 0
      %p131 = por %p129, %p130
      %s133 = sadd.s32 %s132, 1
      %p136 = scmp.eq.s32.totalorder %s21, 3
      %p137 = scmp.ne.s32.totalorder %s132, %s134
      %p138 = scmp.eq.s32.totalorder %s21, 0
      %p139 = por %p137, %p138
      %p140 = scmp.ne.s32.totalorder %s132, %s134
      %p141 = scmp.eq.s32.totalorder %s26, 3
      %p142 = por %p140, %p141
      %p143 = scmp.ne.s32.totalorder %s134, %s135
      %p144 = scmp.eq.s32.totalorder %s26, 0
      %p145 = por %p143, %p144
      %p146 = scmp.ne.s32.totalorder %s134, %s135
      %p147 = scmp.eq.s32.totalorder %s27, 3
      %p148 = por %p146, %p147
      %p150 = scmp.ne.s32.totalorder %s135, %s149
      %p151 = scmp.eq.s32.totalorder %s27, 0
      %p152 = por %p150, %p151
      %s154 = sadd.s32 %s153, 1
      %p157 = scmp.eq.s32.totalorder %s21, 3
      %p158 = scmp.ne.s32.totalorder %s153, %s155
      %p159 = scmp.eq.s32.totalorder %s21, 0
      %p160 = por %p158, %p159
      %p161 = scmp.ne.s32.totalorder %s153, %s155
      %p162 = scmp.eq.s32.totalorder %s26, 3
      %p163 = por %p161, %p162
      %p164 = scmp.ne.s32.totalorder %s155, %s156
      %p165 = scmp.eq.s32.totalorder %s26, 0
      %p166 = por %p164, %p165
      %p167 = scmp.ne.s32.totalorder %s155, %s156
      %p168 = scmp.eq.s32.totalorder %s27, 3
      %p169 = por %p167, %p168
      %p171 = scmp.ne.s32.totalorder %s156, %s170
      %p172 = scmp.eq.s32.totalorder %s27, 0
      %p173 = por %p171, %p172
      %s175 = sadd.s32 %s174, 1
      %p178 = scmp.eq.s32.totalorder %s21, 3
      %p179 = scmp.ne.s32.totalorder %s174, %s176
      %p180 = scmp.eq.s32.totalorder %s21, 0
      %p181 = por %p179, %p180
      %p182 = scmp.ne.s32.totalorder %s174, %s176
      %p183 = scmp.eq.s32.totalorder %s26, 3
      %p184 = por %p182, %p183
      %p185 = scmp.ne.s32.totalorder %s176, %s177
      %p186 = scmp.eq.s32.totalorder %s26, 0
      %p187 = por %p185, %p186
      %p188 = scmp.ne.s32.totalorder %s176, %s177
      %p189 = scmp.eq.s32.totalorder %s27, 3
      %p190 = por %p188, %p189
      %p192 = scmp.ne.s32.totalorder %s177, %s191
      %p193 = scmp.eq.s32.totalorder %s27, 0
      %p194 = por %p192, %p193
      %s196 = sadd.s32 %s195, 1
      %p199 = scmp.eq.s32.totalorder %s21, 3
      %p200 = scmp.ne.s32.totalorder %s195, %s197
      %p201 = scmp.eq.s32.totalorder %s21, 0
      %p202 = por %p200, %p201
      %p203 = scmp.ne.s32.totalorder %s195, %s197
      %p204 = scmp.eq.s32.totalorder %s26, 3
      %p205 = por %p203, %p204
      %p206 = scmp.ne.s32.totalorder %s197, %s198
      %p207 = scmp.eq.s32.totalorder %s26, 0
      %p208 = por %p206, %p207
      %p209 = scmp.ne.s32.totalorder %s197, %s198
      %p210 = scmp.eq.s32.totalorder %s27, 3
      %p211 = por %p209, %p210
      %p213 = scmp.ne.s32.totalorder %s198, %s212
      %p214 = scmp.eq.s32.totalorder %s27, 0
      %p215 = por %p213, %p214
      %s217 = sadd.s32 %s216, 1
      %p220 = scmp.eq.s32.totalorder %s21, 3
      %p221 = scmp.ne.s32.totalorder %s216, %s218
      %p222 = scmp.eq.s32.totalorder %s21, 0
      %p223 = por %p221, %p222
      %p224 = scmp.ne.s32.totalorder %s216, %s218
      %p225 = scmp.eq.s32.totalorder %s26, 3
      %p226 = por %p224, %p225
      %p227 = scmp.ne.s32.totalorder %s218, %s219
      %p228 = scmp.eq.s32.totalorder %s26, 0
      %p229 = por %p227, %p228
      %p230 = scmp.ne.s32.totalorder %s218, %s219
      %p231 = scmp.eq.s32.totalorder %s27, 3
      %p232 = por %p230, %p231
      %p234 = scmp.ne.s32.totalorder %s219, %s233
      %p235 = scmp.eq.s32.totalorder %s27, 0
      %p236 = por %p234, %p235
      %s237 = ssub.s32 %s28, %s40
      %s238 = ssub.s32 %s29, %s36
      %s239 = sor.u32 %s237, %s238
      %p240 = scmp.eq.s32.totalorder %s239, 0
      %s242 = sadd.s32 %s241, 1
      %s243 = scalar_select %p240, %s241, %s242
      %p246 = pneg %p240
      %p247 = scmp.eq.s32.totalorder %s21, 3
      %p248 = por %p246, %p247
      %p249 = scmp.ne.s32.totalorder %s241, %s244
      %p250 = scmp.eq.s32.totalorder %s21, 0
      %p251 = por %p249, %p250
      %p252 = scmp.ne.s32.totalorder %s241, %s244
      %p253 = scmp.eq.s32.totalorder %s26, 3
      %p254 = por %p252, %p253
      %p255 = scmp.ne.s32.totalorder %s244, %s245
      %p256 = scmp.eq.s32.totalorder %s26, 0
      %p257 = por %p255, %p256
      %p258 = scmp.ne.s32.totalorder %s244, %s245
      %p259 = scmp.eq.s32.totalorder %s27, 3
      %p260 = por %p258, %p259
      %p262 = scmp.ne.s32.totalorder %s245, %s261
      %p263 = scmp.eq.s32.totalorder %s27, 0
      %p264 = por %p262, %p263
      %p265 = scmp.le.s32.totalorder 1, %s21
      %p266 = scmp.lt.s32.totalorder %s21, 5
      %p267 = pnand %p265, %p266
      %p268 = pneg %p267
      // Predicated region
      $region9: #{tpu_custom_call.1} parent=5 // pred_check
        _
      $region10: #{tpu_custom_call.1} parent=5 // pred_check_branch
        %270 = sbr.rel (%p267) target = $region12
      $region11: #{tpu_custom_call.1} parent=5 // pred_region
        %s271 = ssub.s32 %s21, 1
        // Predicated region
        $region13: #{tpu_custom_call.1} parent=11 // pred_check
          %p272 = pneg %p82
        $region14: #{tpu_custom_call.1} parent=11 // pred_check_branch
          %274 = sbr.rel (%p272) target = $region16
        $region15: #{tpu_custom_call.1} parent=11 // pred_region
          %276 = vsyncadd [#allocation4], 0
          %s277 = sshll.u32 %s1, 4
          %s278 = int_to_ptr.hbm [resolvable:$true] %s277
          %s279 = sshll.u32 [#allocation3], 4
          %s280 = int_to_ptr.vmem [resolvable:$true] %s279
          %285 = dma.hbm_to_vmem [thread:$0]  %s278, 256, %s280, [#allocation4], 64, 64, 4
        $region16: #{tpu_custom_call.1} parent=11 // pred_fallthru
          _
        // Predicated region
        $region17: #{tpu_custom_call.1} parent=11 // pred_check
          %p286 = pneg %p103
        $region18: #{tpu_custom_call.1} parent=11 // pred_check_branch
          %288 = sbr.rel (%p286) target = $region20
        $region19: #{tpu_custom_call.1} parent=11 // pred_region
          %290 = vsyncadd [#allocation7], 0
          %s292 = sshll.u32 %s2, 4
          %s293 = int_to_ptr.hbm [resolvable:$true] %s292
          %s294 = sshll.u32 [#allocation6], 4
          %s295 = int_to_ptr.vmem [resolvable:$true] %s294
          %297 = dma.hbm_to_vmem [thread:$0]  %s293, 16, %s295, [#allocation7]
        $region20: #{tpu_custom_call.1} parent=11 // pred_fallthru
          _
        // Predicated region
        $region21: #{tpu_custom_call.1} parent=11 // pred_check
          %p298 = pneg %p124
        $region22: #{tpu_custom_call.1} parent=11 // pred_check_branch
          %300 = sbr.rel (%p298) target = $region24
        $region23: #{tpu_custom_call.1} parent=11 // pred_region
          _
        $region24: #{tpu_custom_call.1} parent=11 // pred_fallthru
          _
        // Predicated region
        $region25: #{tpu_custom_call.1} parent=11 // pred_check
          %p301 = pneg %p145
        $region26: #{tpu_custom_call.1} parent=11 // pred_check_branch
          %303 = sbr.rel (%p301) target = $region28
        $region27: #{tpu_custom_call.1} parent=11 // pred_region
          %305 = vsyncadd [#allocation7], 0
          %s307 = sshll.u32 %s4, 4
          %s308 = int_to_ptr.hbm [resolvable:$true] %s307
          %s309 = sshll.u32 [#allocation8], 4
          %s310 = int_to_ptr.vmem [resolvable:$true] %s309
          %312 = dma.hbm_to_vmem [thread:$0]  %s308, 16, %s310, [#allocation7]
        $region28: #{tpu_custom_call.1} parent=11 // pred_fallthru
          _
        // Predicated region
        $region29: #{tpu_custom_call.1} parent=11 // pred_check
          %p313 = pneg %p166
        $region30: #{tpu_custom_call.1} parent=11 // pred_check_branch
          %315 = sbr.rel (%p313) target = $region32
        $region31: #{tpu_custom_call.1} parent=11 // pred_region
          _
        $region32: #{tpu_custom_call.1} parent=11 // pred_fallthru
          _
        // Predicated region
        $region33: #{tpu_custom_call.1} parent=11 // pred_check
          %p316 = pneg %p187
        $region34: #{tpu_custom_call.1} parent=11 // pred_check_branch
          %318 = sbr.rel (%p316) target = $region36
        $region35: #{tpu_custom_call.1} parent=11 // pred_region
          %320 = vsyncadd [#allocation10], 0
          %s322 = sshll.u32 %s6, 4
          %s323 = int_to_ptr.hbm [resolvable:$true] %s322
          %s324 = sshll.u32 [#allocation9], 4
          %s325 = int_to_ptr.vmem [resolvable:$true] %s324
          %327 = dma.hbm_to_vmem [thread:$0]  %s323, 64, %s325, [#allocation10]
        $region36: #{tpu_custom_call.1} parent=11 // pred_fallthru
          _
        // Predicated region
        $region37: #{tpu_custom_call.1} parent=11 // pred_check
          %p328 = pneg %p208
        $region38: #{tpu_custom_call.1} parent=11 // pred_check_branch
          %330 = sbr.rel (%p328) target = $region40
        $region39: #{tpu_custom_call.1} parent=11 // pred_region
          %332 = vsyncadd [#allocation10], 0
          %s333 = sshll.u32 %s7, 4
          %s334 = int_to_ptr.hbm [resolvable:$true] %s333
          %s335 = sshll.u32 [#allocation11], 4
          %s336 = int_to_ptr.vmem [resolvable:$true] %s335
          %341 = dma.hbm_to_vmem [thread:$0]  %s334, 256, %s336, [#allocation10], 64, 64, 4
        $region40: #{tpu_custom_call.1} parent=11 // pred_fallthru
          _
        // Predicated region
        $region41: #{tpu_custom_call.1} parent=11 // pred_check
          %p342 = pneg %p229
        $region42: #{tpu_custom_call.1} parent=11 // pred_check_branch
          %344 = sbr.rel (%p342) target = $region44
        $region43: #{tpu_custom_call.1} parent=11 // pred_region
          _
        $region44: #{tpu_custom_call.1} parent=11 // pred_fallthru
          _
      $region12: #{tpu_custom_call.1} parent=5 // pred_fallthru
        _
      %p345 = scmp.lt.s32.totalorder %s21, 4
      // Predicated region
      $region45: #{tpu_custom_call.1} parent=5 // pred_check
        %p346 = pneg %p345
      $region46: #{tpu_custom_call.1} parent=5 // pred_check_branch
        %348 = sbr.rel (%p346) target = $region48
      $region47: #{tpu_custom_call.1} parent=5 // pred_region
        // Predicated region
        $region49: #{tpu_custom_call.1} parent=47 // pred_check
          %p349 = pneg %p55
        $region50: #{tpu_custom_call.1} parent=47 // pred_check_branch
          %351 = sbr.rel (%p349) target = $region52
        $region51: #{tpu_custom_call.1} parent=47 // pred_region
          %p352 = scmp.lt.s32.totalorder %s28, 1
          %s353 = scalar_select %p352, %s28, 1
          %p354 = scmp.lt.s32.totalorder %s29, 1
          %s355 = scalar_select %p354, %s29, 1
          %s356 = smul.addr %s353, 2
          %s357 = sadd.s32 %s355, %s356
          %s358 = smul.addr %s357, 8
          %s359 = scalar_lea.vmem %s0, %s358
        $region52: #{tpu_custom_call.1} parent=47 // pred_fallthru
          _
      $region48: #{tpu_custom_call.1} parent=5 // pred_fallthru
        _
      %p360 = scmp.le.s32.totalorder 1, %s21
      %p361 = scmp.lt.s32.totalorder %s21, 5
      %p362 = pnand %p360, %p361
      %p363 = pneg %p362
      // Predicated region
      $region53: #{tpu_custom_call.1} parent=5 // pred_check
        _
      $region54: #{tpu_custom_call.1} parent=5 // pred_check_branch
        %365 = sbr.rel (%p362) target = $region56
      $region55: #{tpu_custom_call.1} parent=5 // pred_region
        %s366 = ssub.s32 %s21, 1
        // Predicated region
        $region57: #{tpu_custom_call.1} parent=55 // pred_check
          %p367 = pneg %p82
        $region58: #{tpu_custom_call.1} parent=55 // pred_check_branch
          %369 = sbr.rel (%p367) target = $region60
        $region59: #{tpu_custom_call.1} parent=55 // pred_region
          %371 = dma.done [#allocation4], 256
        $region60: #{tpu_custom_call.1} parent=55 // pred_fallthru
          _
        // Predicated region
        $region61: #{tpu_custom_call.1} parent=55 // pred_check
          %p372 = pneg %p103
        $region62: #{tpu_custom_call.1} parent=55 // pred_check_branch
          %374 = sbr.rel (%p372) target = $region64
        $region63: #{tpu_custom_call.1} parent=55 // pred_region
          %376 = dma.done [#allocation7], 16
        $region64: #{tpu_custom_call.1} parent=55 // pred_fallthru
          _
        // Predicated region
        $region65: #{tpu_custom_call.1} parent=55 // pred_check
          %p377 = pneg %p145
        $region66: #{tpu_custom_call.1} parent=55 // pred_check_branch
          %379 = sbr.rel (%p377) target = $region68
        $region67: #{tpu_custom_call.1} parent=55 // pred_region
          %381 = dma.done [#allocation7], 16
        $region68: #{tpu_custom_call.1} parent=55 // pred_fallthru
          _
        // Predicated region
        $region69: #{tpu_custom_call.1} parent=55 // pred_check
          %p382 = pneg %p187
        $region70: #{tpu_custom_call.1} parent=55 // pred_check_branch
          %384 = sbr.rel (%p382) target = $region72
        $region71: #{tpu_custom_call.1} parent=55 // pred_region
          %386 = dma.done [#allocation10], 64
        $region72: #{tpu_custom_call.1} parent=55 // pred_fallthru
          _
        // Predicated region
        $region73: #{tpu_custom_call.1} parent=55 // pred_check
          %p387 = pneg %p208
        $region74: #{tpu_custom_call.1} parent=55 // pred_check_branch
          %389 = sbr.rel (%p387) target = $region76
        $region75: #{tpu_custom_call.1} parent=55 // pred_region
          %391 = dma.done [#allocation10], 256
        $region76: #{tpu_custom_call.1} parent=55 // pred_fallthru
          _
        %p392 = scmp.lt.s32.totalorder %s30, 1
        %s393 = scalar_select %p392, %s30, 1
        %p394 = scmp.lt.s32.totalorder %s31, 1
        %s395 = scalar_select %p394, %s31, 1
        %s396 = smul.addr %s393, 2
        %s397 = sadd.s32 %s395, %s396
        %s398 = smul.addr %s397, 8
        %s399 = scalar_lea.vmem %s0, %s398
        %p400 = pneg %p61
        %p401 = pneg %p58
        %p402 = pneg %p82
        %p403 = pneg %p79
        %p404 = pneg %p103
        %p405 = pneg %p100
        %p406 = pneg %p124
        %p407 = pneg %p121
        %p408 = pneg %p145
        %p409 = pneg %p142
        %p410 = pneg %p166
        %p411 = pneg %p163
        %p412 = pneg %p187
        %p413 = pneg %p184
        %p414 = pneg %p208
        %p415 = pneg %p205
        %p416 = pneg %p229
        %p417 = pneg %p226
        %p418 = pneg %p257
        %p419 = pneg %p254
        %s420 = sand.u32 %s244, 1
        %s421 = scalar_lea.sflag [#allocation5], %s420
        %s422 = sand.u32 %s244, 1
        %s423 = smul.addr %s422, 8
        %s424 = scalar_lea.vmem [#allocation12], %s423
        %p425 = scmp.lt.s32.totalorder %s30, 1
        %s426 = scalar_select %p425, %s30, 1
        %p427 = scmp.lt.s32.totalorder %s31, 1
        %s428 = scalar_select %p427, %s31, 1
        %s429 = smul.addr %s426, 2
        %s430 = sadd.s32 %s428, %s429
        %s431 = smul.addr %s430, 8
        %s432 = scalar_lea.vmem %s0, %s431
        %p434 = scmp.eq.s32.totalorder %s31, 0
        // Predicated region
        $region77: #{tpu_custom_call.1} parent=55 // pred_check
          %p435 = pneg %p434
        $region78: #{tpu_custom_call.1} parent=55 // pred_check_branch
          %437 = sbr.rel (%p435) target = $region80
        $region79: #{tpu_custom_call.1} parent=55 // pred_region
          %v438 = vld [vmem:[%s8] sm:$0x1]
          %vm439 = vcmask 253952
          %440 = vst.msk [vmem:[#allocation2] sm:$0x1] %vm439, %v438
        $region80: #{tpu_custom_call.1} parent=55 // pred_fallthru
          _
        %v441 = vld [vmem:[%s432] sm:$0xff]
        %v442 = vlaneseq
        %v443 = vshrl.u32 %v442, 7
        %v444 = vlaneseq
        %v445 = vand.u32 %v444, 127
        %vm446 = vcmp.le.s32.totalorder %v445, %v443
        %v447 = vsel %vm446, 1, 0
        %v448 = vcvt.s32.f32 %v447
        %v449 = vld [vmem:[%s3] sm:$0xf]
        %v450 = vmul.f32 %v441, %v441
        %vm451 = vcmask 261120
        %v452 = vsel %vm451, %v450, 0.0
        %453 = vadd.xlane.f32.xlu0 %v452
        %v454 = vpop.xlane.xlu0 %453
        %v455 = vrcp.pop 32.0
        %v456 = vmul.f32 32.0, %v455
        %v457 = vsub.f32 1.0, %v456
        %v458 = vmul.f32 %v455, %v457
        %v459 = vadd.f32 %v455, %v458
        %vm460 = vweird.f32 %v455
        %v461 = vsel %vm460, %v455, %v459
        %v462 = vmul.f32 %v454, %v461
        %v463 = vadd.f32 %v462, 1e-06
        %v464 = vrsqrt.pop %v463
        %v465 = vmul.f32 %v464, %v463
        %v466 = vmul.f32 %v465, %v464
        %v467 = vmul.f32 0.5, %v466
        %v468 = vsub.f32 1.5, %v467
        %v469 = vmul.f32 %v464, %v468
        %vm470 = vweird.f32 %v463
        %vm471 = vweird.f32 %v464
        %vm472 = vmor %vm470, %vm471
        %v473 = vsel %vm472, %v464, %v469
        %v474 = vmul.f32 %v441, %v473
        %v475 = vperm.slane %v449, 0
        %v476 = vmul.f32 %v474, %v475
        %v477 = vpack.c.bf16 %v476, %v476
        %v478 = vld [vmem:[#allocation3] sm:$0xf]
        %v479 = vld [vmem:[#allocation3 + $0x4] sm:$0xf]
        %v480 = vld [vmem:[#allocation3 + $0x8] sm:$0xf]
        %v481 = vld [vmem:[#allocation3 + $0xc] sm:$0xf]
        %v482 = vld [vmem:[#allocation6] sm:$0x1]
        %v484 = vperm.slane %v482, 0
        %v490 = vunpack.c.l.b16 %v478
        %v491 = vunpack.c.l.b16 %v479
        %v492 = vunpack.c.l.b16 %v480
        %v493 = vunpack.c.l.b16 %v481
        %v494 = vpack.c.b16 %v491, %v490
        %v495 = vpack.c.b16 %v493, %v492
        %v499 = vsel %vm451, %v477, 0
        %501 = vmatpush.bf16.msra.mxu0 0
        %502 = vmatpush.bf16.msra.mxu0 0
        %503 = vmatpush.bf16.msra.mxu0 0
        %504 = vmatpush.bf16.msra.mxu0 0
        %505 = vmatpush.bf16.msra.mxu0 0
        %506 = vmatpush.bf16.msra.mxu0 0
        %507 = vmatpush.bf16.msra.mxu0 %v495
        %508 = vmatpush.bf16.msra.mxu0 %v494
        %509 = vmatmul.bf16.gmra.mxu0 %v499
        %v510 = vpop.f32.mrf.mxu0
        %v511 = vadd.f32 %v484, %v510
        %v512 = vpop.f32.mrf.mxu0
        %513 = vdwg.mxu0
        %v514 = vsub.f32 0.0, %v511
        %v515 = vmul.f32 %v514, 1.442695
        %v516 = vpow.pop %v515
        %v517 = vadd.f32 %v516, 1.0
        %v518 = vrcp.pop %v517
        %v519 = vmul.f32 %v511, %v518
        %521 = vrot.lane.b32.xlu0 %v519, 96
        %v522 = vpop.permute.xlu0 %521
        %v524 = vmul.f32 %v511, %v522
        %v525 = vld [vmem:[#allocation8] sm:$0x1]
        %v526 = vmul.f32 %v525, 1.442695
        %v527 = vpow.pop %v526
        %v528 = vsub.f32 0.0, %v527
        %v529 = vmax.f32 %v511, 0.0
        %v530 = vand.u32 2147483647, %v511
        %v531 = vsub.f32 0.0, %v530
        %v532 = vmul.f32 %v531, 1.442695
        %v533 = vpow.pop %v532
        %v534 = vadd.f32 %v533, 1.0
        %v535 = vlog2.pop %v534
        %v536 = vmul.f32 %v535, 0.6931472
        %v537 = vmul.f32 -0.5, %v533
        %v538 = vadd.f32 %v537, 1.0
        %v539 = vmul.f32 %v538, %v533
        %v540 = vand.u32 2147483647, %v533
        %vm541 = vcmp.lt.f32.partialorder %v540, 0.0004427343
        %v542 = vsel %vm541, %v539, %v536
        %v543 = vadd.f32 %v529, %v542
        %v545 = vperm.slane %v528, 0
        %548 = vrot.lane.b32.xlu0 %v543, 32
        %v549 = vpop.permute.xlu0 %548
        %v551 = vmul.f32 %v545, %v549
        %vm552 = vcmask 64512
        %v554 = vsel %vm552, %v448, 0
        %556 = vmatpush.msra.mxu0 0.0
        %557 = vmatpush.msra.mxu0 0.0
        %558 = vmatpush.msra.mxu0 0.0
        %559 = vmatpush.msra.mxu0 0.0
        %560 = vmatpush.msra.mxu0 0.0
        %561 = vmatpush.msra.mxu0 0.0
        %562 = vmatpush.msra.mxu0 0.0
        %563 = vmatpush.msra.mxu0 0.0
        %564 = vmatpush.msra.mxu0 0.0
        %565 = vmatpush.msra.mxu0 0.0
        %566 = vmatpush.msra.mxu0 0.0
        %567 = vmatpush.msra.mxu0 0.0
        %568 = vmatpush.msra.mxu0 0.0
        %569 = vmatpush.msra.mxu0 0.0
        %570 = vmatpush.msra.mxu0 0.0
        %571 = vmatpush.msra.mxu0 %v551
        %572 = vmatmul.f32.gmra.mxu0 %v554
        %v573 = vpop.f32.mrf.mxu0
        %v574 = vadd.f32 0.0, %v573
        %575 = vdwg.mxu0
        %v576 = vld [vmem:[#allocation9] sm:$0xf]
        %v578 = vrot.slane %v574, 7
        %v580 = vadd.f32 %v574, %v578
        %v581 = vmul.f32 %v580, 0.5
        %v582 = vperm.slane %v581, 0
        %v583 = vsub.f32 %v574, %v582
        %v584 = vmul.f32 %v583, 1.442695
        %v585 = vpow.pop %v584
        %vm586 = vcmask 31744
        %v588 = vsel %vm586, %v585, 0
        %vm590 = vcmask 1043456
        %v592 = vsel %vm590, %v576, 0
        %594 = vmatpush.msra.mxu0 0.0
        %595 = vmatpush.msra.mxu0 0.0
        %596 = vmatpush.msra.mxu0 0.0
        %597 = vmatpush.msra.mxu0 0.0
        %598 = vmatpush.msra.mxu0 0.0
        %599 = vmatpush.msra.mxu0 0.0
        %600 = vmatpush.msra.mxu0 0.0
        %601 = vmatpush.msra.mxu0 0.0
        %602 = vmatpush.msra.mxu0 0.0
        %603 = vmatpush.msra.mxu0 0.0
        %604 = vmatpush.msra.mxu0 0.0
        %605 = vmatpush.msra.mxu0 0.0
        %606 = vmatpush.msra.mxu0 0.0
        %607 = vmatpush.msra.mxu0 0.0
        %608 = vmatpush.msra.mxu0 0.0
        %609 = vmatpush.msra.mxu0 %v592
        %610 = vmatmul.f32.gmra.mxu0 %v588
        %v611 = vpop.f32.mrf.mxu0
        %v612 = vadd.f32 0.0, %v611
        %613 = vdwg.mxu0
        %v614 = vsub.f32 %v582, %v574
        %v615 = vmul.f32 %v614, 1.442695
        %v616 = vpow.pop %v615
        %v618 = vsel %vm586, %v616, 0
        %620 = vmatpush.msra.mxu0 0.0
        %621 = vmatpush.msra.mxu0 0.0
        %622 = vmatpush.msra.mxu0 0.0
        %623 = vmatpush.msra.mxu0 0.0
        %624 = vmatpush.msra.mxu0 0.0
        %625 = vmatpush.msra.mxu0 0.0
        %626 = vmatpush.msra.mxu0 0.0
        %627 = vmatpush.msra.mxu0 0.0
        %628 = vmatpush.msra.mxu0 0.0
        %629 = vmatpush.msra.mxu0 0.0
        %630 = vmatpush.msra.mxu0 0.0
        %631 = vmatpush.msra.mxu0 0.0
        %632 = vmatpush.msra.mxu0 0.0
        %633 = vmatpush.msra.mxu0 0.0
        %634 = vmatpush.msra.mxu0 0.0
        %635 = vmatpush.msra.mxu0 %v592
        %636 = vmatmul.f32.gmra.mxu0 %v618
        %v637 = vpop.f32.mrf.mxu0
        %v638 = vadd.f32 0.0, %v637
        %639 = vdwg.mxu0
        %v640 = vpack.c.bf16 %v448, %v448
        %v641 = vmul.f32 %v638, %v524
        %v642 = vpack.c.bf16 %v641, %v641
        %v644 = vsel %vm552, %v640, 0
        %v647 = vsel %vm590, %v642, 0
        %649 = vmatpush.bf16.msra.mxu0 0
        %650 = vmatpush.bf16.msra.mxu0 0
        %651 = vmatpush.bf16.msra.mxu0 0
        %652 = vmatpush.bf16.msra.mxu0 0
        %653 = vmatpush.bf16.msra.mxu0 0
        %654 = vmatpush.bf16.msra.mxu0 0
        %655 = vmatpush.bf16.msra.mxu0 0
        %656 = vmatpush.bf16.msra.mxu0 %v647
        %657 = vmatmul.bf16.gmra.mxu0 %v644
        %v658 = vpop.f32.mrf.mxu0
        %v659 = vadd.f32 0.0, %v658
        %v660 = vpop.f32.mrf.mxu0
        %661 = vdwg.mxu0
        %v662 = vmul.f32 %v612, %v659
        %v663 = vmul.f32 %v574, 1.442695
        %v664 = vpow.pop %v663
        %v666 = vsel %vm586, %v664, 0
        %668 = vmatpush.msra.mxu0 0.0
        %669 = vmatpush.msra.mxu0 0.0
        %670 = vmatpush.msra.mxu0 0.0
        %671 = vmatpush.msra.mxu0 0.0
        %672 = vmatpush.msra.mxu0 0.0
        %673 = vmatpush.msra.mxu0 0.0
        %674 = vmatpush.msra.mxu0 0.0
        %675 = vmatpush.msra.mxu0 0.0
        %676 = vmatpush.msra.mxu0 0.0
        %677 = vmatpush.msra.mxu0 0.0
        %678 = vmatpush.msra.mxu0 0.0
        %679 = vmatpush.msra.mxu0 0.0
        %680 = vmatpush.msra.mxu0 0.0
        %681 = vmatpush.msra.mxu0 0.0
        %682 = vmatpush.msra.mxu0 0.0
        %683 = vmatpush.msra.mxu0 %v592
        %684 = vmatmul.f32.gmra.mxu0 %v666
        %v685 = vpop.f32.mrf.mxu0
        %v686 = vadd.f32 0.0, %v685
        %687 = vdwg.mxu0
        %v688 = vld [vmem:[#allocation2] sm:$0x1]
        %v690 = vperm.slane %v688, 0
        %v692 = vmul.f32 %v686, %v690
        %v693 = vadd.f32 %v662, %v692
        %vm694 = vcmask 261127
        %695 = vst.msk [vmem:[#allocation2 - $0x7] sm:$0x80] %vm694, %v693
        %v696 = vld [vmem:[%s5] sm:$0xff]
        %v697 = vld [vmem:[%s5 + $0x8] sm:$0xff]
        %v698 = vld [vmem:[%s5 + $0x10] sm:$0xff]
        %v699 = vld [vmem:[%s5 + $0x18] sm:$0xff]
        %v701 = vsel %vm451, %v693, 0
        %703 = vmatpush.msra.mxu0 0.0
        %704 = vmatpush.msra.mxu0 0.0
        %705 = vmatpush.msra.mxu0 0.0
        %706 = vmatpush.msra.mxu0 0.0
        %707 = vmatpush.msra.mxu0 0.0
        %708 = vmatpush.msra.mxu0 0.0
        %709 = vmatpush.msra.mxu0 0.0
        %710 = vmatpush.msra.mxu0 0.0
        %711 = vmatpush.msra.mxu0 0.0
        %712 = vmatpush.msra.mxu0 0.0
        %713 = vmatpush.msra.mxu0 0.0
        %714 = vmatpush.msra.mxu0 0.0
        %715 = vmatpush.msra.mxu0 %v699
        %716 = vmatpush.msra.mxu0 %v698
        %717 = vmatpush.msra.mxu0 %v697
        %718 = vmatpush.msra.mxu0 %v696
        %719 = vmatmul.f32.gmra.mxu0 %v701
        %v720 = vpop.f32.mrf.mxu0
        %v721 = vadd.f32 0.0, %v720
        %722 = vdwg.mxu0
        %v723 = vmul.f32 %v721, 0.125
        %v725 = vsel %vm586, %v723, 0
        %727 = vmatpush.msra.mxu0 0.0
        %728 = vmatpush.msra.mxu0 0.0
        %729 = vmatpush.msra.mxu0 0.0
        %730 = vmatpush.msra.mxu0 0.0
        %731 = vmatpush.msra.mxu0 0.0
        %732 = vmatpush.msra.mxu0 0.0
        %733 = vmatpush.msra.mxu0 0.0
        %734 = vmatpush.msra.mxu0 0.0
        %735 = vmatpush.msra.mxu0 0.0
        %736 = vmatpush.msra.mxu0 0.0
        %737 = vmatpush.msra.mxu0 0.0
        %738 = vmatpush.msra.mxu0 0.0
        %739 = vmatpush.msra.mxu0 0.0
        %740 = vmatpush.msra.mxu0 0.0
        %741 = vmatpush.msra.mxu0 0.0
        %742 = vmatpush.msra.mxu0 %v592
        %743 = vmatmul.f32.gmra.mxu0 %v725
        %v744 = vpop.f32.mrf.mxu0
        %v745 = vadd.f32 0.0, %v744
        %746 = vdwg.mxu0
        %v747 = vsub.f32 %v693, %v745
        %v748 = vmul.f32 %v747, %v747
        %v750 = vsel %vm451, %v748, 0
        %752 = vmatpush.msra.mxu0 0.0
        %753 = vmatpush.msra.mxu0 0.0
        %754 = vmatpush.msra.mxu0 0.0
        %755 = vmatpush.msra.mxu0 0.0
        %756 = vmatpush.msra.mxu0 0.0
        %757 = vmatpush.msra.mxu0 0.0
        %758 = vmatpush.msra.mxu0 0.0
        %759 = vmatpush.msra.mxu0 0.0
        %760 = vmatpush.msra.mxu0 0.0
        %761 = vmatpush.msra.mxu0 0.0
        %762 = vmatpush.msra.mxu0 0.0
        %763 = vmatpush.msra.mxu0 0.0
        %764 = vmatpush.msra.mxu0 %v699
        %765 = vmatpush.msra.mxu0 %v698
        %766 = vmatpush.msra.mxu0 %v697
        %767 = vmatpush.msra.mxu0 %v696
        %768 = vmatmul.f32.gmra.mxu0 %v750
        %v769 = vpop.f32.mrf.mxu0
        %v770 = vadd.f32 0.0, %v769
        %771 = vdwg.mxu0
        %v772 = vmul.f32 %v770, 0.125
        %v774 = vsel %vm586, %v772, 0
        %776 = vmatpush.msra.mxu0 0.0
        %777 = vmatpush.msra.mxu0 0.0
        %778 = vmatpush.msra.mxu0 0.0
        %779 = vmatpush.msra.mxu0 0.0
        %780 = vmatpush.msra.mxu0 0.0
        %781 = vmatpush.msra.mxu0 0.0
        %782 = vmatpush.msra.mxu0 0.0
        %783 = vmatpush.msra.mxu0 0.0
        %784 = vmatpush.msra.mxu0 0.0
        %785 = vmatpush.msra.mxu0 0.0
        %786 = vmatpush.msra.mxu0 0.0
        %787 = vmatpush.msra.mxu0 0.0
        %788 = vmatpush.msra.mxu0 0.0
        %789 = vmatpush.msra.mxu0 0.0
        %790 = vmatpush.msra.mxu0 0.0
        %791 = vmatpush.msra.mxu0 %v592
        %792 = vmatmul.f32.gmra.mxu0 %v774
        %v793 = vpop.f32.mrf.mxu0
        %v794 = vadd.f32 1e-05, %v793
        %795 = vdwg.mxu0
        %v796 = vrsqrt.pop %v794
        %v797 = vmul.f32 %v796, %v794
        %v798 = vmul.f32 %v797, %v796
        %v799 = vmul.f32 0.5, %v798
        %v800 = vsub.f32 1.5, %v799
        %v801 = vmul.f32 %v796, %v800
        %vm802 = vweird.f32 %v794
        %vm803 = vweird.f32 %v796
        %vm804 = vmor %vm802, %vm803
        %v805 = vsel %vm804, %v796, %v801
        %v806 = vmul.f32 %v747, %v805
        %v807 = vperm.slane %v449, 1
        %v808 = vmul.f32 %v806, %v807
        %v809 = vperm.slane %v449, 2
        %v810 = vadd.f32 %v808, %v809
        %v811 = vpack.c.bf16 %v810, %v810
        %v812 = vld [vmem:[#allocation11] sm:$0xf]
        %v813 = vld [vmem:[#allocation11 + $0x4] sm:$0xf]
        %v814 = vld [vmem:[#allocation11 + $0x8] sm:$0xf]
        %v815 = vld [vmem:[#allocation11 + $0xc] sm:$0xf]
        %v816 = vperm.slane %v449, 3
        %v821 = vunpack.c.l.b16 %v812
        %v822 = vunpack.c.l.b16 %v813
        %v823 = vunpack.c.l.b16 %v814
        %v824 = vunpack.c.l.b16 %v815
        %v825 = vpack.c.b16 %v822, %v821
        %v826 = vpack.c.b16 %v824, %v823
        %v830 = vsel %vm451, %v811, 0
        %832 = vmatpush.bf16.msra.mxu0 0
        %833 = vmatpush.bf16.msra.mxu0 0
        %834 = vmatpush.bf16.msra.mxu0 0
        %835 = vmatpush.bf16.msra.mxu0 0
        %836 = vmatpush.bf16.msra.mxu0 0
        %837 = vmatpush.bf16.msra.mxu0 0
        %838 = vmatpush.bf16.msra.mxu0 %v826
        %839 = vmatpush.bf16.msra.mxu0 %v825
        %840 = vmatmul.bf16.gmra.mxu0 %v830
        %v841 = vpop.f32.mrf.mxu0
        %v842 = vadd.f32 %v816, %v841
        %v843 = vpop.f32.mrf.mxu0
        %844 = vdwg.mxu0
        %845 = vrot.lane.b32.xlu0 %v519, 64
        %v846 = vpop.permute.xlu0 %845
        %v848 = vmul.f32 %v842, %v846
        %v849 = vadd.f32 %v848, %v441
        %850 = vst.msk [vmem:[%s424] sm:$0xff] %vm451, %v849
        %s851 = sand.u32 %s244, 1
        %s852 = scalar_lea.sflag [#allocation5], %s851
        %s853 = sand.u32 %s244, 1
        %s854 = smul.addr %s853, 8
        %s855 = scalar_lea.vmem [#allocation12], %s854
        // Predicated region
        $region81: #{tpu_custom_call.1} parent=55 // pred_check
          %p856 = pneg %p254
        $region82: #{tpu_custom_call.1} parent=55 // pred_check_branch
          %858 = sbr.rel (%p856) target = $region84
        $region83: #{tpu_custom_call.1} parent=55 // pred_region
          %860 = vsyncadd %s852, 0
          %s861 = smul.addr %s30, 2
          %s862 = sadd.s32 %s31, %s861
          %s863 = smul.addr %s862, 8
          %s864 = scalar_lea.hbm %s9, %s863
          %s866 = sshll.u32 %s855, 4
          %s867 = int_to_ptr.vmem [resolvable:$true] %s866
          %s868 = sshll.u32 %s864, 4
          %s869 = int_to_ptr.hbm [resolvable:$true] %s868
          %871 = dma.vmem_to_hbm [thread:$0]  %s867, 128, %s869, %s852
        $region84: #{tpu_custom_call.1} parent=55 // pred_fallthru
          _
      $region56: #{tpu_custom_call.1} parent=5 // pred_fallthru
        _
      %p872 = scmp.le.s32.totalorder 2, %s21
      // Predicated region
      $region85: #{tpu_custom_call.1} parent=5 // pred_check
        %p873 = pneg %p872
      $region86: #{tpu_custom_call.1} parent=5 // pred_check_branch
        %875 = sbr.rel (%p873) target = $region88
      $region87: #{tpu_custom_call.1} parent=5 // pred_region
        %s876 = ssub.s32 %s21, 2
        // Predicated region
        $region89: #{tpu_custom_call.1} parent=87 // pred_check
          %p877 = pneg %p260
        $region90: #{tpu_custom_call.1} parent=87 // pred_check_branch
          %879 = sbr.rel (%p877) target = $region92
        $region91: #{tpu_custom_call.1} parent=87 // pred_region
          %s880 = sand.u32 %s245, 1
          %s881 = scalar_lea.sflag [#allocation5], %s880
          %s882 = sand.u32 %s245, 1
          %s883 = smul.addr %s882, 8
          %s884 = scalar_lea.vmem [#allocation12], %s883
          %886 = dma.done %s881, 128
        $region92: #{tpu_custom_call.1} parent=87 // pred_fallthru
          _
      $region88: #{tpu_custom_call.1} parent=5 // pred_fallthru
        _
    $region6: #{tpu_custom_call.1} parent=1 // loop_footer
      %s25 = sadd.s32 1, %s21
    $region7: #{tpu_custom_call.1} parent=1 // loop_footer_branch
      %20 = sbr.rel target = $region3
    $region8: #{tpu_custom_call.1} parent=1 // loop_exit
      _
    %887 = vsyncpa [#allocation4], 1
    %s888 = scalar_lea.sflag [#allocation4], 1
    %889 = vsyncpa %s888, 1
    %890 = vsyncpa [#allocation7], 1
    %891 = vsyncpa [#allocation10], 1
    %892 = vsyncpa [#allocation5], 1
    %s893 = scalar_lea.sflag [#allocation5], 1
    %894 = vsyncpa %s893, 1

</llo_original>
